<compile_context>
chip_gen: v7x
topology: tpu7x:2x2x1
jax: 0.10.0
libtpu: 0.0.40
codegen_flags: <defaults>
</compile_context>

<pallas_src>
import functools
import math

import jax
import jax.numpy as jnp
from jax.experimental import pallas as pl
from jax.experimental.pallas import tpu as pltpu


def _sdp_kernel(scale, q_ref, k_ref, v_ref, o_ref):
    # q_ref, k_ref: (BB, H, S, D)   -- BB batch elements per grid step, all heads at once
    # v_ref:        (BB, S_k, H, D) -- values in their ORIGINAL [B, H, S, D] layout; since the
    #                                  module requires H == S, axis 1 is the key index here.
    # o_ref:        (BB, S, H*D)    -- lane-dense packed output slab
    bb, n_heads, _, _ = q_ref.shape

    for i in range(bb):  # static unroll over the small batch block; leading-axis slices are cheap
        q = q_ref[i] * scale                  # (H, S, D); fold 1/sqrt(dk) into the smaller operand
        k = k_ref[i]                          # (H, S, D)

        # scores[h, q, k] = sum_d q[h, q, d] * k[h, k, d] -- one leading-batch dot, no K transpose.
        s = jax.lax.dot_general(
            q, k,
            dimension_numbers=(((2,), (2,)), ((0,), (0,))),
            preferred_element_type=jnp.float32,
        )                                     # (H, S, S) f32

        # Numerically-stable softmax over the key axis (PyTorch nn.Softmax(dim=3)); probs stay f32.
        m = jnp.max(s, axis=-1, keepdims=True)
        p = jnp.exp(s - m)                    # unnormalized probabilities (H, S, S)
        inv_l = pl.reciprocal(jnp.sum(p, axis=-1, keepdims=True), approx=False)   # (H, S, 1)

        # out[h, q, d] = sum_k p[h, q, k] * values[k, h, d]:
        # ONE lane-layout-aware relayout of the small v block, then ONE batched PV matmul
        # (replaces the previous per-head strided v slices + per-head dots + concatenate of outs).
        v_t = pltpu.einshape("khd->hkd", v_ref[i]).astype(jnp.float32)            # (H, S_k, D)
        o = jax.lax.dot_general(
            p, v_t,
            dimension_numbers=(((2,), (1,)), ((0,), (0,))),
            preferred_element_type=jnp.float32,
        )                                     # (H, S, D)
        o = o * inv_l                         # normalize the (S, D) outputs, not the (S, S) probs

        # Single lane-dense store per batch element: (S, H*D); heads are cheap leading-axis slices.
        o_ref[i] = jnp.concatenate([o[h] for h in range(n_heads)], axis=-1).astype(o_ref.dtype)


def scaled_dot_product(queries, keys, values, dk):
    """Pallas TPU implementation of ScaledDotProduct.forward (mask=None)."""
    B, H, S, D = queries.shape
    assert keys.shape == (B, H, S, D)
    assert values.shape == (B, H, S, D)
    # torch.matmul(softmax, values.transpose(1, 2)) requires H == S to be valid.
    assert H == S, "original module's transpose(values, 1, 2) requires H == S"
    # TODO(synk): the module's mask/tril branch is not implemented (default mask=None).

    scale = 1.0 / math.sqrt(dk)
    itemsize = jnp.dtype(queries.dtype).itemsize

    # ---- generation-aware VMEM budget (64 MiB/TC on v7x vs 128 MiB on v5e/v6e) ----
    try:
        vmem_cap = int(pltpu.get_tpu_info().vmem_capacity_bytes)
    except Exception:  # conservative fallback if the query is unavailable
        vmem_cap = 64 << 20
    budget = max(vmem_cap // 2 - (4 << 20), 16 << 20)   # ~28 MiB on v7x, ~60 MiB on v5e/v6e

    # Per-batch-element working set: q/k/v/o blocks double-buffered + f32 intermediates.
    per_elem = 2 * 4 * H * S * D * itemsize + (2 * H * S * S + H * S * D) * 4

    # ---- batch-block size: biggest block under the VMEM budget (capped to bound the
    # static unroll), but keep >= 2 grid steps when B >= 2 so v7x's two TensorCores
    # both get work; on 1-TC chips this costs only one extra ~0.35us grid step.
    if B <= 1:
        bb = 1
    else:
        max_bb = max(1, min(B // 2, budget // max(per_elem, 1), 8))
        bb = 1
        for cand in range(1, int(max_bb) + 1):
            if B % cand == 0:
                bb = cand
    grid = (B // bb,)

    vmem_limit = int(min(max(bb * per_elem + (8 << 20), 32 << 20), budget + (8 << 20)))

    cost = pl.CostEstimate(
        flops=4 * B * H * S * S * D,          # QK^T + PV matmuls
        transcendentals=B * H * S * S,        # softmax exps
        bytes_accessed=4 * B * H * S * D * itemsize,
    )

    qkv_spec = pl.BlockSpec((bb, H, S, D), lambda i: (i, 0, 0, 0))
    out_packed = pl.pallas_call(
        functools.partial(_sdp_kernel, scale),
        out_shape=jax.ShapeDtypeStruct((B, S, H * D), queries.dtype),
        grid_spec=pltpu.PrefetchScalarGridSpec(
            num_scalar_prefetch=0,
            grid=grid,
            in_specs=[qkv_spec, qkv_spec, qkv_spec],   # V in its ORIGINAL layout (no HBM transpose)
            out_specs=pl.BlockSpec((bb, S, H * D), lambda i: (i, 0, 0)),
        ),
        compiler_params=pltpu.CompilerParams(
            dimension_semantics=("parallel",),
            vmem_limit_bytes=vmem_limit,
        ),
        cost_estimate=cost,
    )(queries, keys, values)

    # Un-pack the lane-dense slab back to the module's [B, H, S, D] output layout
    # (pure XLA layout plumbing outside the kernel; skippable if the consumer takes (B,S,H*D)).
    return jnp.swapaxes(out_packed.reshape(B, S, H, D), 1, 2)


if __name__ == "__main__":
    key = jax.random.PRNGKey(0)
    kq, kk, kv = jax.random.split(key, 3)

    # Small shapes consistent with the module; H == S required (see layout note).
    B, H, S, D = 2, 8, 8, 32
    latent = 32  # dk is used only for the 1/sqrt(dk) scaling

    q = jax.random.normal(kq, (B, H, S, D), dtype=jnp.float32)
    k = jax.random.normal(kk, (B, H, S, D), dtype=jnp.float32)
    v = jax.random.normal(kv, (B, H, S, D), dtype=jnp.float32)

    out = scaled_dot_product(q, k, v, dk=latent)
    out = jax.block_until_ready(out)

    # Pure-JAX reference mirroring the PyTorch forward exactly.
    comp = jnp.einsum("bhqd,bhkd->bhqk", q, k) / math.sqrt(latent)
    probs = jax.nn.softmax(comp, axis=3)
    ref = jnp.matmul(probs, jnp.swapaxes(v, 1, 2))

    assert out.shape == (B, H, S, D)
    assert jnp.allclose(out, ref, atol=2e-5, rtol=2e-5)
    print("KERNEL_OK")
</pallas_src>

<mosaic_0001>
module attributes {stable_mosaic.version = 11 : i64} {
  func.func @_sdp_kernel(%arg0: i32, %arg1: memref<1x8x8x32xf32, #tpu.memory_space<vmem>>, %arg2: memref<1x8x8x32xf32, #tpu.memory_space<vmem>>, %arg3: memref<1x8x8x32xf32, #tpu.memory_space<vmem>>, %arg4: memref<1x8x256xf32, #tpu.memory_space<vmem>>) attributes {dimension_semantics = [#tpu.dimension_semantics<parallel>], iteration_bounds = array<i64: 2>, scalar_prefetch = 0 : i64, scratch_operands = 0 : i64, tpu.core_type = #tpu.core_type<tc>, window_params = [{transform_indices = @transform_0, window_bounds = array<i64: 1, 8, 8, 32>}, {transform_indices = @transform_1, window_bounds = array<i64: 1, 8, 8, 32>}, {transform_indices = @transform_2, window_bounds = array<i64: 1, 8, 8, 32>}, {transform_indices = @transform_3, window_bounds = array<i64: 1, 8, 256>}]} {
    %c0 = arith.constant 0 : index
    %c0_0 = arith.constant 0 : index
    %c0_1 = arith.constant 0 : index
    %c0_2 = arith.constant 0 : index
    %0 = vector.load %arg1[%c0, %c0_0, %c0_1, %c0_2] : memref<1x8x8x32xf32, #tpu.memory_space<vmem>>, vector<1x8x8x32xf32>
    %1 = vector.shape_cast %0 : vector<1x8x8x32xf32> to vector<8x8x32xf32>
    %cst = arith.constant 0.176776692 : f32
    %2 = vector.broadcast %cst : f32 to vector<8x8x32xf32>
    %3 = arith.mulf %1, %2 : vector<8x8x32xf32>
    %c0_3 = arith.constant 0 : index
    %c0_4 = arith.constant 0 : index
    %c0_5 = arith.constant 0 : index
    %c0_6 = arith.constant 0 : index
    %4 = vector.load %arg2[%c0_3, %c0_4, %c0_5, %c0_6] : memref<1x8x8x32xf32, #tpu.memory_space<vmem>>, vector<1x8x8x32xf32>
    %5 = vector.shape_cast %4 : vector<1x8x8x32xf32> to vector<8x8x32xf32>
    %cst_7 = arith.constant dense<0.000000e+00> : vector<8x8x8xf32>
    %6 = tpu.matmul %3, %5, %cst_7 {dimension_numbers = #tpu.dot_dimension_numbers<[2], [2], [1], [1], [0, 0, 0, 1, 1, 1], [0], [0]>} : vector<8x8x32xf32>, vector<8x8x32xf32>, vector<8x8x8xf32> -> vector<8x8x8xf32>
    %cst_8 = arith.constant dense<0xFF800000> : vector<8x8xf32>
    %7 = vector.multi_reduction <maximumf>, %6, %cst_8 [2] : vector<8x8x8xf32> to vector<8x8xf32>
    %8 = vector.shape_cast %7 : vector<8x8xf32> to vector<8x8x1xf32>
    %9 = vector.broadcast %8 : vector<8x8x1xf32> to vector<8x8x8xf32>
    %10 = arith.subf %6, %9 : vector<8x8x8xf32>
    %11 = math.exp %10 : vector<8x8x8xf32>
    %cst_9 = arith.constant dense<0.000000e+00> : vector<8x8xf32>
    %12 = vector.multi_reduction <add>, %11, %cst_9 [2] : vector<8x8x8xf32> to vector<8x8xf32>
    %13 = vector.shape_cast %12 : vector<8x8xf32> to vector<8x8x1xf32>
    %14 = tpu.reciprocal %13 : vector<8x8x1xf32> -> vector<8x8x1xf32>
    %c0_10 = arith.constant 0 : index
    %c0_11 = arith.constant 0 : index
    %c0_12 = arith.constant 0 : index
    %c0_13 = arith.constant 0 : index
    %15 = vector.load %arg3[%c0_10, %c0_11, %c0_12, %c0_13] : memref<1x8x8x32xf32, #tpu.memory_space<vmem>>, vector<1x8x8x32xf32>
    %16 = vector.shape_cast %15 : vector<1x8x8x32xf32> to vector<8x8x32xf32>
    %17 = tpu.transpose %16, [1, 0, 2] : vector<8x8x32xf32> -> vector<8x8x32xf32>
    %cst_14 = arith.constant dense<0.000000e+00> : vector<8x8x32xf32>
    %18 = tpu.matmul %11, %17, %cst_14 {dimension_numbers = #tpu.dot_dimension_numbers<[2], [1], [1], [2], [0, 0, 0, 1, 1, 2], [0], [0]>} : vector<8x8x8xf32>, vector<8x8x32xf32>, vector<8x8x32xf32> -> vector<8x8x32xf32>
    %19 = vector.broadcast %14 : vector<8x8x1xf32> to vector<8x8x32xf32>
    %20 = arith.mulf %18, %19 : vector<8x8x32xf32>
    %21 = vector.extract_strided_slice %20 {offsets = [0, 0, 0], sizes = [1, 8, 32], strides = [1, 1, 1]} : vector<8x8x32xf32> to vector<1x8x32xf32>
    %22 = vector.shape_cast %21 : vector<1x8x32xf32> to vector<8x32xf32>
    %23 = vector.extract_strided_slice %20 {offsets = [1, 0, 0], sizes = [1, 8, 32], strides = [1, 1, 1]} : vector<8x8x32xf32> to vector<1x8x32xf32>
    %24 = vector.shape_cast %23 : vector<1x8x32xf32> to vector<8x32xf32>
    %25 = vector.extract_strided_slice %20 {offsets = [2, 0, 0], sizes = [1, 8, 32], strides = [1, 1, 1]} : vector<8x8x32xf32> to vector<1x8x32xf32>
    %26 = vector.shape_cast %25 : vector<1x8x32xf32> to vector<8x32xf32>
    %27 = vector.extract_strided_slice %20 {offsets = [3, 0, 0], sizes = [1, 8, 32], strides = [1, 1, 1]} : vector<8x8x32xf32> to vector<1x8x32xf32>
    %28 = vector.shape_cast %27 : vector<1x8x32xf32> to vector<8x32xf32>
    %29 = vector.extract_strided_slice %20 {offsets = [4, 0, 0], sizes = [1, 8, 32], strides = [1, 1, 1]} : vector<8x8x32xf32> to vector<1x8x32xf32>
    %30 = vector.shape_cast %29 : vector<1x8x32xf32> to vector<8x32xf32>
    %31 = vector.extract_strided_slice %20 {offsets = [5, 0, 0], sizes = [1, 8, 32], strides = [1, 1, 1]} : vector<8x8x32xf32> to vector<1x8x32xf32>
    %32 = vector.shape_cast %31 : vector<1x8x32xf32> to vector<8x32xf32>
    %33 = vector.extract_strided_slice %20 {offsets = [6, 0, 0], sizes = [1, 8, 32], strides = [1, 1, 1]} : vector<8x8x32xf32> to vector<1x8x32xf32>
    %34 = vector.shape_cast %33 : vector<1x8x32xf32> to vector<8x32xf32>
    %35 = vector.extract_strided_slice %20 {offsets = [7, 0, 0], sizes = [1, 8, 32], strides = [1, 1, 1]} : vector<8x8x32xf32> to vector<1x8x32xf32>
    %36 = vector.shape_cast %35 : vector<1x8x32xf32> to vector<8x32xf32>
    %37 = tpu.concatenate %22, %24, %26, %28, %30, %32, %34, %36 in 1 : vector<8x32xf32>, vector<8x32xf32>, vector<8x32xf32>, vector<8x32xf32>, vector<8x32xf32>, vector<8x32xf32>, vector<8x32xf32>, vector<8x32xf32> -> vector<8x256xf32>
    %c0_15 = arith.constant 0 : index
    %c0_16 = arith.constant 0 : index
    %c0_17 = arith.constant 0 : index
    %38 = vector.load %arg4[%c0_15, %c0_16, %c0_17] : memref<1x8x256xf32, #tpu.memory_space<vmem>>, vector<1x8x256xf32>
    %39 = vector.shape_cast %38 : vector<1x8x256xf32> to vector<8x256xf32>
    %40 = vector.shape_cast %37 : vector<8x256xf32> to vector<1x8x256xf32>
    tpu.vector_store %arg4[%c0_15, %c0_16, %c0_17], %40 {strides = array<i32>} : memref<1x8x256xf32, #tpu.memory_space<vmem>>, vector<1x8x256xf32>,
    return
  }
  func.func @transform_0(%arg0: i32) -> (i32, i32, i32, i32) {
    %c0_i32 = arith.constant 0 : i32
    %c0_i32_0 = arith.constant 0 : i32
    %c0_i32_1 = arith.constant 0 : i32
    %c0_i32_2 = arith.constant 0 : i32
    return %arg0, %c0_i32, %c0_i32_0, %c0_i32_1 : i32, i32, i32, i32
  }
  func.func @transform_1(%arg0: i32) -> (i32, i32, i32, i32) {
    %c0_i32 = arith.constant 0 : i32
    %c0_i32_0 = arith.constant 0 : i32
    %c0_i32_1 = arith.constant 0 : i32
    %c0_i32_2 = arith.constant 0 : i32
    return %arg0, %c0_i32, %c0_i32_0, %c0_i32_1 : i32, i32, i32, i32
  }
  func.func @transform_2(%arg0: i32) -> (i32, i32, i32, i32) {
    %c0_i32 = arith.constant 0 : i32
    %c0_i32_0 = arith.constant 0 : i32
    %c0_i32_1 = arith.constant 0 : i32
    %c0_i32_2 = arith.constant 0 : i32
    return %arg0, %c0_i32, %c0_i32_0, %c0_i32_1 : i32, i32, i32, i32
  }
  func.func @transform_3(%arg0: i32) -> (i32, i32, i32) {
    %c0_i32 = arith.constant 0 : i32
    %c0_i32_0 = arith.constant 0 : i32
    %c0_i32_1 = arith.constant 0 : i32
    return %arg0, %c0_i32, %c0_i32_0 : i32, i32, i32
  }
}

</mosaic_0001>

<llo_original>
// kernel: tpu_custom_call.1
$region0: #{tpu_custom_call.1}
  #allocation0 [shape = 'u32[]', space=smem, size = 0x4, offset = 0x4, fixed_abs, tag = 'smem constant byte address 0x4 - core index']
  #allocation1 [shape = 'u32[144,128]{1,0:T(1,128)}', space=vmem, size = 0x12000, scoped, tag = 'internal scratch']
  %s0 = inlined_call_operand.hbm [shape: f32[2,8,8,32], index: 0, kind: input, shape index: {}]
  %s1 = inlined_call_operand.hbm [shape: f32[2,8,8,32], index: 1, kind: input, shape index: {}]
  %s2 = inlined_call_operand.hbm [shape: f32[2,8,8,32], index: 2, kind: input, shape index: {}]
  %s3 = inlined_call_operand.hbm [shape: f32[2,8,256], index: 3, kind: output, shape index: {}]
  %s4 = sld [smem:[#allocation0]]
  $region57: #{tpu_custom_call.1} parent=0
    _
  %s6 = ssub.s32 1, %s4
  %s7 = scalar_select 0, %s6, %s4
  $region1: #{tpu_custom_call.1} parent=0
    #allocation2 [shape = 'u8[65536]{0}', space=vmem, size = 0x10000, scoped, tag = 'input window, operand 0']
    #allocation3 [shape = 's32[2]{0}', space=sflag, size = 0x8, scoped, tag = 'scoped memory for tpu_custom_call.1']
    #allocation4 [shape = 's32[2]{0}', space=sflag, size = 0x8, scoped, tag = 'scoped memory for tpu_custom_call.1']
    #allocation5 [shape = 'u8[65536]{0}', space=vmem, size = 0x10000, scoped, tag = 'input window, operand 1']
    #allocation6 [shape = 's32[2]{0}', space=sflag, size = 0x8, scoped, tag = 'scoped memory for tpu_custom_call.1']
    #allocation7 [shape = 'u8[65536]{0}', space=vmem, size = 0x10000, scoped, tag = 'input window, operand 2']
    #allocation8 [shape = 'u8[16384]{0}', space=vmem, size = 0x4000, scoped, tag = 'output window, operand 0']
    %8 = vsyncpa [#allocation3], 0
    %s9 = scalar_lea.sflag [#allocation3], 1
    %10 = vsyncpa %s9, 0
    %11 = vsyncpa [#allocation6], 0
    %s12 = scalar_lea.sflag [#allocation6], 1
    %13 = vsyncpa %s12, 0
    %14 = vsyncpa [#allocation4], 0
    %s15 = scalar_lea.sflag [#allocation4], 1
    %16 = vsyncpa %s15, 0
    loop: start=0, step=1, limit=4
    $region2: #{tpu_custom_call.1} parent=1 // loop_pre_header
      _
    $region3: #{tpu_custom_call.1} parent=1 // loop_header
      %s18 = sphi 0, %s22
      %p19 = scmp.ge.s32.totalorder %s18, 4
      %s28 = sphi 0, %s30
      %s31 = sphi 0, %s28
      %s32 = sphi 0, %s31
      %s48 = sphi 0, %s32
      %s54 = sphi 0, %s56
      %s57 = sphi 0, %s54
      %s58 = sphi 0, %s57
      %s74 = sphi 0, %s58
      %s80 = sphi 0, %s82
      %s83 = sphi 0, %s80
      %s84 = sphi 0, %s83
      %s100 = sphi 0, %s84
      %s106 = sphi 0, %s108
      %s109 = sphi 0, %s106
      %s110 = sphi 0, %s109
      %s126 = sphi 0, %s110
    $region4: #{tpu_custom_call.1} parent=1 // loop_header_branch
      %21 = sbr.rel (%p19) target = $region8
    $region5: #{tpu_custom_call.1} parent=1 // loop_body
      %s23 = ssub.s32 %s18, 1
      %s24 = ssub.s32 %s18, 2
      %s25 = sadd.s32 %s18, 1
      %s26 = ssub.s32 %s18, %s25
      %p27 = scmp.eq.s32.totalorder %s26, 0
      %s29 = sadd.s32 %s28, 1
      %s30 = scalar_select %p27, %s28, %s29
      %p33 = pneg %p27
      %p34 = scmp.eq.s32.totalorder %s18, 1
      %p35 = por %p33, %p34
      %p36 = scmp.ne.s32.totalorder %s28, %s31
      %p37 = scmp.eq.s32.totalorder %s18, 0
      %p38 = por %p36, %p37
      %p39 = scmp.ne.s32.totalorder %s28, %s31
      %p40 = scmp.eq.s32.totalorder %s23, 1
      %p41 = por %p39, %p40
      %p42 = scmp.ne.s32.totalorder %s31, %s32
      %p43 = scmp.eq.s32.totalorder %s23, 0
      %p44 = por %p42, %p43
      %p45 = scmp.ne.s32.totalorder %s31, %s32
      %p46 = scmp.eq.s32.totalorder %s24, 1
      %p47 = por %p45, %p46
      %p49 = scmp.ne.s32.totalorder %s32, %s48
      %p50 = scmp.eq.s32.totalorder %s24, 0
      %p51 = por %p49, %p50
      %s52 = ssub.s32 %s18, %s25
      %p53 = scmp.eq.s32.totalorder %s52, 0
      %s55 = sadd.s32 %s54, 1
      %s56 = scalar_select %p53, %s54, %s55
      %p59 = pneg %p53
      %p60 = scmp.eq.s32.totalorder %s18, 1
      %p61 = por %p59, %p60
      %p62 = scmp.ne.s32.totalorder %s54, %s57
      %p63 = scmp.eq.s32.totalorder %s18, 0
      %p64 = por %p62, %p63
      %p65 = scmp.ne.s32.totalorder %s54, %s57
      %p66 = scmp.eq.s32.totalorder %s23, 1
      %p67 = por %p65, %p66
      %p68 = scmp.ne.s32.totalorder %s57, %s58
      %p69 = scmp.eq.s32.totalorder %s23, 0
      %p70 = por %p68, %p69
      %p71 = scmp.ne.s32.totalorder %s57, %s58
      %p72 = scmp.eq.s32.totalorder %s24, 1
      %p73 = por %p71, %p72
      %p75 = scmp.ne.s32.totalorder %s58, %s74
      %p76 = scmp.eq.s32.totalorder %s24, 0
      %p77 = por %p75, %p76
      %s78 = ssub.s32 %s18, %s25
      %p79 = scmp.eq.s32.totalorder %s78, 0
      %s81 = sadd.s32 %s80, 1
      %s82 = scalar_select %p79, %s80, %s81
      %p85 = pneg %p79
      %p86 = scmp.eq.s32.totalorder %s18, 1
      %p87 = por %p85, %p86
      %p88 = scmp.ne.s32.totalorder %s80, %s83
      %p89 = scmp.eq.s32.totalorder %s18, 0
      %p90 = por %p88, %p89
      %p91 = scmp.ne.s32.totalorder %s80, %s83
      %p92 = scmp.eq.s32.totalorder %s23, 1
      %p93 = por %p91, %p92
      %p94 = scmp.ne.s32.totalorder %s83, %s84
      %p95 = scmp.eq.s32.totalorder %s23, 0
      %p96 = por %p94, %p95
      %p97 = scmp.ne.s32.totalorder %s83, %s84
      %p98 = scmp.eq.s32.totalorder %s24, 1
      %p99 = por %p97, %p98
      %p101 = scmp.ne.s32.totalorder %s84, %s100
      %p102 = scmp.eq.s32.totalorder %s24, 0
      %p103 = por %p101, %p102
      %s104 = ssub.s32 %s18, %s25
      %p105 = scmp.eq.s32.totalorder %s104, 0
      %s107 = sadd.s32 %s106, 1
      %s108 = scalar_select %p105, %s106, %s107
      %p111 = pneg %p105
      %p112 = scmp.eq.s32.totalorder %s18, 1
      %p113 = por %p111, %p112
      %p114 = scmp.ne.s32.totalorder %s106, %s109
      %p115 = scmp.eq.s32.totalorder %s18, 0
      %p116 = por %p114, %p115
      %p117 = scmp.ne.s32.totalorder %s106, %s109
      %p118 = scmp.eq.s32.totalorder %s23, 1
      %p119 = por %p117, %p118
      %p120 = scmp.ne.s32.totalorder %s109, %s110
      %p121 = scmp.eq.s32.totalorder %s23, 0
      %p122 = por %p120, %p121
      %p123 = scmp.ne.s32.totalorder %s109, %s110
      %p124 = scmp.eq.s32.totalorder %s24, 1
      %p125 = por %p123, %p124
      %p127 = scmp.ne.s32.totalorder %s110, %s126
      %p128 = scmp.eq.s32.totalorder %s24, 0
      %p129 = por %p127, %p128
      %p130 = scmp.le.s32.totalorder 1, %s18
      %p131 = scmp.lt.s32.totalorder %s18, 3
      %p132 = pnand %p130, %p131
      %p133 = pneg %p132
      // Predicated region
      $region9: #{tpu_custom_call.1} parent=5 // pred_check
        _
      $region10: #{tpu_custom_call.1} parent=5 // pred_check_branch
        %135 = sbr.rel (%p132) target = $region12
      $region11: #{tpu_custom_call.1} parent=5 // pred_region
        %s136 = ssub.s32 %s18, 1
      $region12: #{tpu_custom_call.1} parent=5 // pred_fallthru
        _
      %p137 = scmp.lt.s32.totalorder %s18, 2
      // Predicated region
      $region13: #{tpu_custom_call.1} parent=5 // pred_check
        %p138 = pneg %p137
      $region14: #{tpu_custom_call.1} parent=5 // pred_check_branch
        %140 = sbr.rel (%p138) target = $region16
      $region15: #{tpu_custom_call.1} parent=5 // pred_region
        // Predicated region
        $region17: #{tpu_custom_call.1} parent=15 // pred_check
          %p141 = pneg %p38
        $region18: #{tpu_custom_call.1} parent=15 // pred_check_branch
          %143 = sbr.rel (%p141) target = $region20
        $region19: #{tpu_custom_call.1} parent=15 // pred_region
          %s144 = sand.u32 %s28, 1
          %s145 = scalar_lea.sflag [#allocation3], %s144
          %s146 = sand.u32 %s28, 1
          %s147 = smul.addr %s146, 64
          %s148 = scalar_lea.vmem [#allocation2], %s147
          %s150 = ssub.s32 1024, 1024
          %151 = vsyncadd %s145, %s150
          %s152 = smul.addr %s18, 8
          %s153 = smul.addr %s152, 128
          %s154 = scalar_lea.hbm %s0, %s153
          %s155 = sshll.u32 %s148, 4
          %s156 = int_to_ptr.vmem [resolvable:$true] %s155
          %161 = dma.hbm_to_vmem [thread:$0]  %s154, 1024, %s156, %s145, 128, 128, 8
        $region20: #{tpu_custom_call.1} parent=15 // pred_fallthru
          _
        // Predicated region
        $region21: #{tpu_custom_call.1} parent=15 // pred_check
          %p162 = pneg %p64
        $region22: #{tpu_custom_call.1} parent=15 // pred_check_branch
          %164 = sbr.rel (%p162) target = $region24
        $region23: #{tpu_custom_call.1} parent=15 // pred_region
          %s165 = sand.u32 %s18, 1
          %s166 = scalar_lea.sflag [#allocation6], %s165
          %s167 = sand.u32 %s54, 1
          %s168 = smul.addr %s167, 64
          %s169 = scalar_lea.vmem [#allocation5], %s168
          %s171 = ssub.s32 1024, 1024
          %172 = vsyncadd %s166, %s171
          %s173 = smul.addr %s18, 8
          %s174 = smul.addr %s173, 128
          %s175 = scalar_lea.hbm %s1, %s174
          %s176 = sshll.u32 %s169, 4
          %s177 = int_to_ptr.vmem [resolvable:$true] %s176
          %182 = dma.hbm_to_vmem [thread:$0]  %s175, 1024, %s177, %s166, 128, 128, 8
        $region24: #{tpu_custom_call.1} parent=15 // pred_fallthru
          _
        // Predicated region
        $region25: #{tpu_custom_call.1} parent=15 // pred_check
          %p183 = pneg %p90
        $region26: #{tpu_custom_call.1} parent=15 // pred_check_branch
          %185 = sbr.rel (%p183) target = $region28
        $region27: #{tpu_custom_call.1} parent=15 // pred_region
          %s186 = sand.u32 %s18, 1
          %s187 = scalar_lea.sflag [#allocation6], %s186
          %s188 = sand.u32 %s80, 1
          %s189 = smul.addr %s188, 64
          %s190 = scalar_lea.vmem [#allocation7], %s189
          %s192 = ssub.s32 1024, 1024
          %193 = vsyncadd %s187, %s192
          %s194 = smul.addr %s18, 8
          %s195 = smul.addr %s194, 128
          %s196 = scalar_lea.hbm %s2, %s195
          %s197 = sshll.u32 %s190, 4
          %s198 = int_to_ptr.vmem [resolvable:$true] %s197
          %203 = dma.hbm_to_vmem [thread:$0]  %s196, 1024, %s198, %s187, 128, 128, 8
        $region28: #{tpu_custom_call.1} parent=15 // pred_fallthru
          _
      $region16: #{tpu_custom_call.1} parent=5 // pred_fallthru
        _
      %p204 = scmp.le.s32.totalorder 1, %s18
      %p205 = scmp.lt.s32.totalorder %s18, 3
      %p206 = pnand %p204, %p205
      %p207 = pneg %p206
      // Predicated region
      $region29: #{tpu_custom_call.1} parent=5 // pred_check
        _
      $region30: #{tpu_custom_call.1} parent=5 // pred_check_branch
        %209 = sbr.rel (%p206) target = $region32
      $region31: #{tpu_custom_call.1} parent=5 // pred_region
        %s210 = ssub.s32 %s18, 1
        %s211 = sand.u32 %s31, 1
        %s212 = scalar_lea.sflag [#allocation3], %s211
        %s213 = sand.u32 %s31, 1
        %s214 = smul.addr %s213, 64
        %s215 = scalar_lea.vmem [#allocation2], %s214
        // Predicated region
        $region33: #{tpu_custom_call.1} parent=31 // pred_check
          %p216 = pneg %p44
        $region34: #{tpu_custom_call.1} parent=31 // pred_check_branch
          %218 = sbr.rel (%p216) target = $region36
        $region35: #{tpu_custom_call.1} parent=31 // pred_region
          %219 = dma.done %s212, 1024
        $region36: #{tpu_custom_call.1} parent=31 // pred_fallthru
          _
        %s220 = sand.u32 %s23, 1
        %s221 = scalar_lea.sflag [#allocation6], %s220
        %s222 = sand.u32 %s57, 1
        %s223 = smul.addr %s222, 64
        %s224 = scalar_lea.vmem [#allocation5], %s223
        // Predicated region
        $region37: #{tpu_custom_call.1} parent=31 // pred_check
          %p225 = pneg %p70
        $region38: #{tpu_custom_call.1} parent=31 // pred_check_branch
          %227 = sbr.rel (%p225) target = $region40
        $region39: #{tpu_custom_call.1} parent=31 // pred_region
          %228 = dma.done %s221, 1024
        $region40: #{tpu_custom_call.1} parent=31 // pred_fallthru
          _
        %s229 = sand.u32 %s23, 1
        %s230 = scalar_lea.sflag [#allocation6], %s229
        %s231 = sand.u32 %s83, 1
        %s232 = smul.addr %s231, 64
        %s233 = scalar_lea.vmem [#allocation7], %s232
        // Predicated region
        $region41: #{tpu_custom_call.1} parent=31 // pred_check
          %p234 = pneg %p96
        $region42: #{tpu_custom_call.1} parent=31 // pred_check_branch
          %236 = sbr.rel (%p234) target = $region44
        $region43: #{tpu_custom_call.1} parent=31 // pred_region
          %237 = dma.done %s230, 1024
        $region44: #{tpu_custom_call.1} parent=31 // pred_fallthru
          _
        %s238 = sand.u32 %s31, 1
        %s239 = scalar_lea.sflag [#allocation3], %s238
        %s240 = sand.u32 %s31, 1
        %s241 = smul.addr %s240, 64
        %s242 = scalar_lea.vmem [#allocation2], %s241
        %p243 = pneg %p44
        %p244 = pneg %p41
        %s245 = sand.u32 %s23, 1
        %s246 = scalar_lea.sflag [#allocation6], %s245
        %s247 = sand.u32 %s57, 1
        %s248 = smul.addr %s247, 64
        %s249 = scalar_lea.vmem [#allocation5], %s248
        %p250 = pneg %p70
        %p251 = pneg %p67
        %s252 = sand.u32 %s23, 1
        %s253 = scalar_lea.sflag [#allocation6], %s252
        %s254 = sand.u32 %s83, 1
        %s255 = smul.addr %s254, 64
        %s256 = scalar_lea.vmem [#allocation7], %s255
        %p257 = pneg %p96
        %p258 = pneg %p93
        %p259 = pneg %p122
        %p260 = pneg %p119
        %s261 = sand.u32 %s109, 1
        %s262 = scalar_lea.sflag [#allocation4], %s261
        %s263 = sand.u32 %s109, 1
        %s264 = smul.addr %s263, 16
        %s265 = scalar_lea.vmem [#allocation8], %s264
        %v266 = vld [vmem:[%s215] sm:$0xff]
        %v267 = vld [vmem:[%s215 + $0x8] sm:$0xff]
        %v268 = vld [vmem:[%s215 + $0x10] sm:$0xff]
        %v269 = vld [vmem:[%s215 + $0x18] sm:$0xff]
        %v270 = vld [vmem:[%s215 + $0x20] sm:$0xff]
        %v271 = vld [vmem:[%s215 + $0x28] sm:$0xff]
        %v272 = vld [vmem:[%s215 + $0x30] sm:$0xff]
        %v273 = vld [vmem:[%s215 + $0x38] sm:$0xff]
        %v274 = vmul.f32 %v266, 0.17677669
        %v275 = vmul.f32 %v267, 0.17677669
        %v276 = vmul.f32 %v268, 0.17677669
        %v277 = vmul.f32 %v269, 0.17677669
        %v278 = vmul.f32 %v270, 0.17677669
        %v279 = vmul.f32 %v271, 0.17677669
        %v280 = vmul.f32 %v272, 0.17677669
        %v281 = vmul.f32 %v273, 0.17677669
        %v282 = vld [vmem:[%s224] sm:$0xff]
        %v283 = vld [vmem:[%s224 + $0x8] sm:$0xff]
        %v284 = vld [vmem:[%s224 + $0x10] sm:$0xff]
        %v285 = vld [vmem:[%s224 + $0x18] sm:$0xff]
        %v286 = vld [vmem:[%s224 + $0x20] sm:$0xff]
        %v287 = vld [vmem:[%s224 + $0x28] sm:$0xff]
        %v288 = vld [vmem:[%s224 + $0x30] sm:$0xff]
        %v289 = vld [vmem:[%s224 + $0x38] sm:$0xff]
        %vm290 = vcmask 261120
        %v292 = vsel %vm290, %v274, 0
        %v295 = vsel %vm290, %v282, 0
        %297 = vmatprep.subr.mxu0 0.0
        %298 = vmatpush1.xpose.msra.mxu0 %v295
        %299 = vmatprep.subr.mxu0 0.0
        %300 = vmatpush1.xpose.msra.mxu0 0.0
        %301 = vmatprep.subr.mxu0 0.0
        %302 = vmatpush1.xpose.msra.mxu0 0.0
        %303 = vmatprep.subr.mxu0 0.0
        %304 = vmatpush1.xpose.msra.mxu0 0.0
        %305 = vmatprep.subr.mxu0 0.0
        %306 = vmatpush1.xpose.msra.mxu0 0.0
        %307 = vmatprep.subr.mxu0 0.0
        %308 = vmatpush1.xpose.msra.mxu0 0.0
        %309 = vmatprep.subr.mxu0 0.0
        %310 = vmatpush1.xpose.msra.mxu0 0.0
        %311 = vmatprep.subr.mxu0 0.0
        %312 = vmatpush1.xpose.msra.mxu0 0.0
        %313 = vmatprep.subr.mxu0 0.0
        %314 = vmatpush1.xpose.msra.mxu0 0.0
        %315 = vmatprep.subr.mxu0 0.0
        %316 = vmatpush1.xpose.msra.mxu0 0.0
        %317 = vmatprep.subr.mxu0 0.0
        %318 = vmatpush1.xpose.msra.mxu0 0.0
        %319 = vmatprep.subr.mxu0 0.0
        %320 = vmatpush1.xpose.msra.mxu0 0.0
        %321 = vmatprep.subr.mxu0 0.0
        %322 = vmatpush1.xpose.msra.mxu0 0.0
        %323 = vmatprep.subr.mxu0 0.0
        %324 = vmatpush1.xpose.msra.mxu0 0.0
        %325 = vmatprep.subr.mxu0 0.0
        %326 = vmatpush1.xpose.msra.mxu0 0.0
        %327 = vmatprep.subr.mxu0 0.0
        %328 = vmatpush1.xpose.msra.mxu0 0.0
        %329 = vmatprep.subr.mxu0 0.0
        %330 = vmatpush1.xpose.msra.mxu0 0.0
        %331 = vmatprep.subr.mxu0 0.0
        %332 = vmatpush1.xpose.msra.mxu0 0.0
        %333 = vmatprep.subr.mxu0 0.0
        %334 = vmatpush1.xpose.msra.mxu0 0.0
        %335 = vmatprep.subr.mxu0 0.0
        %336 = vmatpush1.xpose.msra.mxu0 0.0
        %337 = vmatprep.subr.mxu0 0.0
        %338 = vmatpush1.xpose.msra.mxu0 0.0
        %339 = vmatprep.subr.mxu0 0.0
        %340 = vmatpush1.xpose.msra.mxu0 0.0
        %341 = vmatprep.subr.mxu0 0.0
        %342 = vmatpush1.xpose.msra.mxu0 0.0
        %343 = vmatprep.subr.mxu0 0.0
        %344 = vmatpush1.xpose.msra.mxu0 0.0
        %345 = vmatprep.subr.mxu0 0.0
        %346 = vmatpush1.xpose.msra.mxu0 0.0
        %347 = vmatprep.subr.mxu0 0.0
        %348 = vmatpush1.xpose.msra.mxu0 0.0
        %349 = vmatprep.subr.mxu0 0.0
        %350 = vmatpush1.xpose.msra.mxu0 0.0
        %351 = vmatprep.subr.mxu0 0.0
        %352 = vmatpush1.xpose.msra.mxu0 0.0
        %353 = vmatprep.subr.mxu0 0.0
        %354 = vmatpush1.xpose.msra.mxu0 0.0
        %355 = vmatprep.subr.mxu0 0.0
        %356 = vmatpush1.xpose.msra.mxu0 0.0
        %357 = vmatprep.subr.mxu0 0.0
        %358 = vmatpush1.xpose.msra.mxu0 0.0
        %359 = vmatprep.subr.mxu0 0.0
        %360 = vmatpush1.xpose.msra.mxu0 0.0
        %361 = vmatprep.mubr.f32.mxu0 0.0
        %362 = vmatmul.mubr.f32.gmra.mrb[0].mxu0 %v292
        %v363 = vpop.f32.mrb[0].mxu0
        %v364 = vadd.f32 0.0, %v363
        %v365 = vpop.f32.mrb[0].mxu0
        %366 = vdwg.mxu0
        %v368 = vsel %vm290, %v275, 0
        %v371 = vsel %vm290, %v283, 0
        %373 = vmatprep.subr.mxu0 0.0
        %374 = vmatpush1.xpose.msra.mxu0 %v371
        %375 = vmatprep.subr.mxu0 0.0
        %376 = vmatpush1.xpose.msra.mxu0 0.0
        %377 = vmatprep.subr.mxu0 0.0
        %378 = vmatpush1.xpose.msra.mxu0 0.0
        %379 = vmatprep.subr.mxu0 0.0
        %380 = vmatpush1.xpose.msra.mxu0 0.0
        %381 = vmatprep.subr.mxu0 0.0
        %382 = vmatpush1.xpose.msra.mxu0 0.0
        %383 = vmatprep.subr.mxu0 0.0
        %384 = vmatpush1.xpose.msra.mxu0 0.0
        %385 = vmatprep.subr.mxu0 0.0
        %386 = vmatpush1.xpose.msra.mxu0 0.0
        %387 = vmatprep.subr.mxu0 0.0
        %388 = vmatpush1.xpose.msra.mxu0 0.0
        %389 = vmatprep.subr.mxu0 0.0
        %390 = vmatpush1.xpose.msra.mxu0 0.0
        %391 = vmatprep.subr.mxu0 0.0
        %392 = vmatpush1.xpose.msra.mxu0 0.0
        %393 = vmatprep.subr.mxu0 0.0
        %394 = vmatpush1.xpose.msra.mxu0 0.0
        %395 = vmatprep.subr.mxu0 0.0
        %396 = vmatpush1.xpose.msra.mxu0 0.0
        %397 = vmatprep.subr.mxu0 0.0
        %398 = vmatpush1.xpose.msra.mxu0 0.0
        %399 = vmatprep.subr.mxu0 0.0
        %400 = vmatpush1.xpose.msra.mxu0 0.0
        %401 = vmatprep.subr.mxu0 0.0
        %402 = vmatpush1.xpose.msra.mxu0 0.0
        %403 = vmatprep.subr.mxu0 0.0
        %404 = vmatpush1.xpose.msra.mxu0 0.0
        %405 = vmatprep.subr.mxu0 0.0
        %406 = vmatpush1.xpose.msra.mxu0 0.0
        %407 = vmatprep.subr.mxu0 0.0
        %408 = vmatpush1.xpose.msra.mxu0 0.0
        %409 = vmatprep.subr.mxu0 0.0
        %410 = vmatpush1.xpose.msra.mxu0 0.0
        %411 = vmatprep.subr.mxu0 0.0
        %412 = vmatpush1.xpose.msra.mxu0 0.0
        %413 = vmatprep.subr.mxu0 0.0
        %414 = vmatpush1.xpose.msra.mxu0 0.0
        %415 = vmatprep.subr.mxu0 0.0
        %416 = vmatpush1.xpose.msra.mxu0 0.0
        %417 = vmatprep.subr.mxu0 0.0
        %418 = vmatpush1.xpose.msra.mxu0 0.0
        %419 = vmatprep.subr.mxu0 0.0
        %420 = vmatpush1.xpose.msra.mxu0 0.0
        %421 = vmatprep.subr.mxu0 0.0
        %422 = vmatpush1.xpose.msra.mxu0 0.0
        %423 = vmatprep.subr.mxu0 0.0
        %424 = vmatpush1.xpose.msra.mxu0 0.0
        %425 = vmatprep.subr.mxu0 0.0
        %426 = vmatpush1.xpose.msra.mxu0 0.0
        %427 = vmatprep.subr.mxu0 0.0
        %428 = vmatpush1.xpose.msra.mxu0 0.0
        %429 = vmatprep.subr.mxu0 0.0
        %430 = vmatpush1.xpose.msra.mxu0 0.0
        %431 = vmatprep.subr.mxu0 0.0
        %432 = vmatpush1.xpose.msra.mxu0 0.0
        %433 = vmatprep.subr.mxu0 0.0
        %434 = vmatpush1.xpose.msra.mxu0 0.0
        %435 = vmatprep.subr.mxu0 0.0
        %436 = vmatpush1.xpose.msra.mxu0 0.0
        %437 = vmatprep.mubr.f32.mxu0 0.0
        %438 = vmatmul.mubr.f32.gmra.mrb[0].mxu0 %v368
        %v439 = vpop.f32.mrb[0].mxu0
        %v440 = vadd.f32 0.0, %v439
        %v441 = vpop.f32.mrb[0].mxu0
        %442 = vdwg.mxu0
        %v444 = vsel %vm290, %v276, 0
        %v447 = vsel %vm290, %v284, 0
        %449 = vmatprep.subr.mxu0 0.0
        %450 = vmatpush1.xpose.msra.mxu0 %v447
        %451 = vmatprep.subr.mxu0 0.0
        %452 = vmatpush1.xpose.msra.mxu0 0.0
        %453 = vmatprep.subr.mxu0 0.0
        %454 = vmatpush1.xpose.msra.mxu0 0.0
        %455 = vmatprep.subr.mxu0 0.0
        %456 = vmatpush1.xpose.msra.mxu0 0.0
        %457 = vmatprep.subr.mxu0 0.0
        %458 = vmatpush1.xpose.msra.mxu0 0.0
        %459 = vmatprep.subr.mxu0 0.0
        %460 = vmatpush1.xpose.msra.mxu0 0.0
        %461 = vmatprep.subr.mxu0 0.0
        %462 = vmatpush1.xpose.msra.mxu0 0.0
        %463 = vmatprep.subr.mxu0 0.0
        %464 = vmatpush1.xpose.msra.mxu0 0.0
        %465 = vmatprep.subr.mxu0 0.0
        %466 = vmatpush1.xpose.msra.mxu0 0.0
        %467 = vmatprep.subr.mxu0 0.0
        %468 = vmatpush1.xpose.msra.mxu0 0.0
        %469 = vmatprep.subr.mxu0 0.0
        %470 = vmatpush1.xpose.msra.mxu0 0.0
        %471 = vmatprep.subr.mxu0 0.0
        %472 = vmatpush1.xpose.msra.mxu0 0.0
        %473 = vmatprep.subr.mxu0 0.0
        %474 = vmatpush1.xpose.msra.mxu0 0.0
        %475 = vmatprep.subr.mxu0 0.0
        %476 = vmatpush1.xpose.msra.mxu0 0.0
        %477 = vmatprep.subr.mxu0 0.0
        %478 = vmatpush1.xpose.msra.mxu0 0.0
        %479 = vmatprep.subr.mxu0 0.0
        %480 = vmatpush1.xpose.msra.mxu0 0.0
        %481 = vmatprep.subr.mxu0 0.0
        %482 = vmatpush1.xpose.msra.mxu0 0.0
        %483 = vmatprep.subr.mxu0 0.0
        %484 = vmatpush1.xpose.msra.mxu0 0.0
        %485 = vmatprep.subr.mxu0 0.0
        %486 = vmatpush1.xpose.msra.mxu0 0.0
        %487 = vmatprep.subr.mxu0 0.0
        %488 = vmatpush1.xpose.msra.mxu0 0.0
        %489 = vmatprep.subr.mxu0 0.0
        %490 = vmatpush1.xpose.msra.mxu0 0.0
        %491 = vmatprep.subr.mxu0 0.0
        %492 = vmatpush1.xpose.msra.mxu0 0.0
        %493 = vmatprep.subr.mxu0 0.0
        %494 = vmatpush1.xpose.msra.mxu0 0.0
        %495 = vmatprep.subr.mxu0 0.0
        %496 = vmatpush1.xpose.msra.mxu0 0.0
        %497 = vmatprep.subr.mxu0 0.0
        %498 = vmatpush1.xpose.msra.mxu0 0.0
        %499 = vmatprep.subr.mxu0 0.0
        %500 = vmatpush1.xpose.msra.mxu0 0.0
        %501 = vmatprep.subr.mxu0 0.0
        %502 = vmatpush1.xpose.msra.mxu0 0.0
        %503 = vmatprep.subr.mxu0 0.0
        %504 = vmatpush1.xpose.msra.mxu0 0.0
        %505 = vmatprep.subr.mxu0 0.0
        %506 = vmatpush1.xpose.msra.mxu0 0.0
        %507 = vmatprep.subr.mxu0 0.0
        %508 = vmatpush1.xpose.msra.mxu0 0.0
        %509 = vmatprep.subr.mxu0 0.0
        %510 = vmatpush1.xpose.msra.mxu0 0.0
        %511 = vmatprep.subr.mxu0 0.0
        %512 = vmatpush1.xpose.msra.mxu0 0.0
        %513 = vmatprep.mubr.f32.mxu0 0.0
        %514 = vmatmul.mubr.f32.gmra.mrb[0].mxu0 %v444
        %v515 = vpop.f32.mrb[0].mxu0
        %v516 = vadd.f32 0.0, %v515
        %v517 = vpop.f32.mrb[0].mxu0
        %518 = vdwg.mxu0
        %v520 = vsel %vm290, %v277, 0
        %v523 = vsel %vm290, %v285, 0
        %525 = vmatprep.subr.mxu0 0.0
        %526 = vmatpush1.xpose.msra.mxu0 %v523
        %527 = vmatprep.subr.mxu0 0.0
        %528 = vmatpush1.xpose.msra.mxu0 0.0
        %529 = vmatprep.subr.mxu0 0.0
        %530 = vmatpush1.xpose.msra.mxu0 0.0
        %531 = vmatprep.subr.mxu0 0.0
        %532 = vmatpush1.xpose.msra.mxu0 0.0
        %533 = vmatprep.subr.mxu0 0.0
        %534 = vmatpush1.xpose.msra.mxu0 0.0
        %535 = vmatprep.subr.mxu0 0.0
        %536 = vmatpush1.xpose.msra.mxu0 0.0
        %537 = vmatprep.subr.mxu0 0.0
        %538 = vmatpush1.xpose.msra.mxu0 0.0
        %539 = vmatprep.subr.mxu0 0.0
        %540 = vmatpush1.xpose.msra.mxu0 0.0
        %541 = vmatprep.subr.mxu0 0.0
        %542 = vmatpush1.xpose.msra.mxu0 0.0
        %543 = vmatprep.subr.mxu0 0.0
        %544 = vmatpush1.xpose.msra.mxu0 0.0
        %545 = vmatprep.subr.mxu0 0.0
        %546 = vmatpush1.xpose.msra.mxu0 0.0
        %547 = vmatprep.subr.mxu0 0.0
        %548 = vmatpush1.xpose.msra.mxu0 0.0
        %549 = vmatprep.subr.mxu0 0.0
        %550 = vmatpush1.xpose.msra.mxu0 0.0
        %551 = vmatprep.subr.mxu0 0.0
        %552 = vmatpush1.xpose.msra.mxu0 0.0
        %553 = vmatprep.subr.mxu0 0.0
        %554 = vmatpush1.xpose.msra.mxu0 0.0
        %555 = vmatprep.subr.mxu0 0.0
        %556 = vmatpush1.xpose.msra.mxu0 0.0
        %557 = vmatprep.subr.mxu0 0.0
        %558 = vmatpush1.xpose.msra.mxu0 0.0
        %559 = vmatprep.subr.mxu0 0.0
        %560 = vmatpush1.xpose.msra.mxu0 0.0
        %561 = vmatprep.subr.mxu0 0.0
        %562 = vmatpush1.xpose.msra.mxu0 0.0
        %563 = vmatprep.subr.mxu0 0.0
        %564 = vmatpush1.xpose.msra.mxu0 0.0
        %565 = vmatprep.subr.mxu0 0.0
        %566 = vmatpush1.xpose.msra.mxu0 0.0
        %567 = vmatprep.subr.mxu0 0.0
        %568 = vmatpush1.xpose.msra.mxu0 0.0
        %569 = vmatprep.subr.mxu0 0.0
        %570 = vmatpush1.xpose.msra.mxu0 0.0
        %571 = vmatprep.subr.mxu0 0.0
        %572 = vmatpush1.xpose.msra.mxu0 0.0
        %573 = vmatprep.subr.mxu0 0.0
        %574 = vmatpush1.xpose.msra.mxu0 0.0
        %575 = vmatprep.subr.mxu0 0.0
        %576 = vmatpush1.xpose.msra.mxu0 0.0
        %577 = vmatprep.subr.mxu0 0.0
        %578 = vmatpush1.xpose.msra.mxu0 0.0
        %579 = vmatprep.subr.mxu0 0.0
        %580 = vmatpush1.xpose.msra.mxu0 0.0
        %581 = vmatprep.subr.mxu0 0.0
        %582 = vmatpush1.xpose.msra.mxu0 0.0
        %583 = vmatprep.subr.mxu0 0.0
        %584 = vmatpush1.xpose.msra.mxu0 0.0
        %585 = vmatprep.subr.mxu0 0.0
        %586 = vmatpush1.xpose.msra.mxu0 0.0
        %587 = vmatprep.subr.mxu0 0.0
        %588 = vmatpush1.xpose.msra.mxu0 0.0
        %589 = vmatprep.mubr.f32.mxu0 0.0
        %590 = vmatmul.mubr.f32.gmra.mrb[0].mxu0 %v520
        %v591 = vpop.f32.mrb[0].mxu0
        %v592 = vadd.f32 0.0, %v591
        %v593 = vpop.f32.mrb[0].mxu0
        %594 = vdwg.mxu0
        %v596 = vsel %vm290, %v278, 0
        %v599 = vsel %vm290, %v286, 0
        %601 = vmatprep.subr.mxu0 0.0
        %602 = vmatpush1.xpose.msra.mxu0 %v599
        %603 = vmatprep.subr.mxu0 0.0
        %604 = vmatpush1.xpose.msra.mxu0 0.0
        %605 = vmatprep.subr.mxu0 0.0
        %606 = vmatpush1.xpose.msra.mxu0 0.0
        %607 = vmatprep.subr.mxu0 0.0
        %608 = vmatpush1.xpose.msra.mxu0 0.0
        %609 = vmatprep.subr.mxu0 0.0
        %610 = vmatpush1.xpose.msra.mxu0 0.0
        %611 = vmatprep.subr.mxu0 0.0
        %612 = vmatpush1.xpose.msra.mxu0 0.0
        %613 = vmatprep.subr.mxu0 0.0
        %614 = vmatpush1.xpose.msra.mxu0 0.0
        %615 = vmatprep.subr.mxu0 0.0
        %616 = vmatpush1.xpose.msra.mxu0 0.0
        %617 = vmatprep.subr.mxu0 0.0
        %618 = vmatpush1.xpose.msra.mxu0 0.0
        %619 = vmatprep.subr.mxu0 0.0
        %620 = vmatpush1.xpose.msra.mxu0 0.0
        %621 = vmatprep.subr.mxu0 0.0
        %622 = vmatpush1.xpose.msra.mxu0 0.0
        %623 = vmatprep.subr.mxu0 0.0
        %624 = vmatpush1.xpose.msra.mxu0 0.0
        %625 = vmatprep.subr.mxu0 0.0
        %626 = vmatpush1.xpose.msra.mxu0 0.0
        %627 = vmatprep.subr.mxu0 0.0
        %628 = vmatpush1.xpose.msra.mxu0 0.0
        %629 = vmatprep.subr.mxu0 0.0
        %630 = vmatpush1.xpose.msra.mxu0 0.0
        %631 = vmatprep.subr.mxu0 0.0
        %632 = vmatpush1.xpose.msra.mxu0 0.0
        %633 = vmatprep.subr.mxu0 0.0
        %634 = vmatpush1.xpose.msra.mxu0 0.0
        %635 = vmatprep.subr.mxu0 0.0
        %636 = vmatpush1.xpose.msra.mxu0 0.0
        %637 = vmatprep.subr.mxu0 0.0
        %638 = vmatpush1.xpose.msra.mxu0 0.0
        %639 = vmatprep.subr.mxu0 0.0
        %640 = vmatpush1.xpose.msra.mxu0 0.0
        %641 = vmatprep.subr.mxu0 0.0
        %642 = vmatpush1.xpose.msra.mxu0 0.0
        %643 = vmatprep.subr.mxu0 0.0
        %644 = vmatpush1.xpose.msra.mxu0 0.0
        %645 = vmatprep.subr.mxu0 0.0
        %646 = vmatpush1.xpose.msra.mxu0 0.0
        %647 = vmatprep.subr.mxu0 0.0
        %648 = vmatpush1.xpose.msra.mxu0 0.0
        %649 = vmatprep.subr.mxu0 0.0
        %650 = vmatpush1.xpose.msra.mxu0 0.0
        %651 = vmatprep.subr.mxu0 0.0
        %652 = vmatpush1.xpose.msra.mxu0 0.0
        %653 = vmatprep.subr.mxu0 0.0
        %654 = vmatpush1.xpose.msra.mxu0 0.0
        %655 = vmatprep.subr.mxu0 0.0
        %656 = vmatpush1.xpose.msra.mxu0 0.0
        %657 = vmatprep.subr.mxu0 0.0
        %658 = vmatpush1.xpose.msra.mxu0 0.0
        %659 = vmatprep.subr.mxu0 0.0
        %660 = vmatpush1.xpose.msra.mxu0 0.0
        %661 = vmatprep.subr.mxu0 0.0
        %662 = vmatpush1.xpose.msra.mxu0 0.0
        %663 = vmatprep.subr.mxu0 0.0
        %664 = vmatpush1.xpose.msra.mxu0 0.0
        %665 = vmatprep.mubr.f32.mxu0 0.0
        %666 = vmatmul.mubr.f32.gmra.mrb[0].mxu0 %v596
        %v667 = vpop.f32.mrb[0].mxu0
        %v668 = vadd.f32 0.0, %v667
        %v669 = vpop.f32.mrb[0].mxu0
        %670 = vdwg.mxu0
        %v672 = vsel %vm290, %v279, 0
        %v675 = vsel %vm290, %v287, 0
        %677 = vmatprep.subr.mxu0 0.0
        %678 = vmatpush1.xpose.msra.mxu0 %v675
        %679 = vmatprep.subr.mxu0 0.0
        %680 = vmatpush1.xpose.msra.mxu0 0.0
        %681 = vmatprep.subr.mxu0 0.0
        %682 = vmatpush1.xpose.msra.mxu0 0.0
        %683 = vmatprep.subr.mxu0 0.0
        %684 = vmatpush1.xpose.msra.mxu0 0.0
        %685 = vmatprep.subr.mxu0 0.0
        %686 = vmatpush1.xpose.msra.mxu0 0.0
        %687 = vmatprep.subr.mxu0 0.0
        %688 = vmatpush1.xpose.msra.mxu0 0.0
        %689 = vmatprep.subr.mxu0 0.0
        %690 = vmatpush1.xpose.msra.mxu0 0.0
        %691 = vmatprep.subr.mxu0 0.0
        %692 = vmatpush1.xpose.msra.mxu0 0.0
        %693 = vmatprep.subr.mxu0 0.0
        %694 = vmatpush1.xpose.msra.mxu0 0.0
        %695 = vmatprep.subr.mxu0 0.0
        %696 = vmatpush1.xpose.msra.mxu0 0.0
        %697 = vmatprep.subr.mxu0 0.0
        %698 = vmatpush1.xpose.msra.mxu0 0.0
        %699 = vmatprep.subr.mxu0 0.0
        %700 = vmatpush1.xpose.msra.mxu0 0.0
        %701 = vmatprep.subr.mxu0 0.0
        %702 = vmatpush1.xpose.msra.mxu0 0.0
        %703 = vmatprep.subr.mxu0 0.0
        %704 = vmatpush1.xpose.msra.mxu0 0.0
        %705 = vmatprep.subr.mxu0 0.0
        %706 = vmatpush1.xpose.msra.mxu0 0.0
        %707 = vmatprep.subr.mxu0 0.0
        %708 = vmatpush1.xpose.msra.mxu0 0.0
        %709 = vmatprep.subr.mxu0 0.0
        %710 = vmatpush1.xpose.msra.mxu0 0.0
        %711 = vmatprep.subr.mxu0 0.0
        %712 = vmatpush1.xpose.msra.mxu0 0.0
        %713 = vmatprep.subr.mxu0 0.0
        %714 = vmatpush1.xpose.msra.mxu0 0.0
        %715 = vmatprep.subr.mxu0 0.0
        %716 = vmatpush1.xpose.msra.mxu0 0.0
        %717 = vmatprep.subr.mxu0 0.0
        %718 = vmatpush1.xpose.msra.mxu0 0.0
        %719 = vmatprep.subr.mxu0 0.0
        %720 = vmatpush1.xpose.msra.mxu0 0.0
        %721 = vmatprep.subr.mxu0 0.0
        %722 = vmatpush1.xpose.msra.mxu0 0.0
        %723 = vmatprep.subr.mxu0 0.0
        %724 = vmatpush1.xpose.msra.mxu0 0.0
        %725 = vmatprep.subr.mxu0 0.0
        %726 = vmatpush1.xpose.msra.mxu0 0.0
        %727 = vmatprep.subr.mxu0 0.0
        %728 = vmatpush1.xpose.msra.mxu0 0.0
        %729 = vmatprep.subr.mxu0 0.0
        %730 = vmatpush1.xpose.msra.mxu0 0.0
        %731 = vmatprep.subr.mxu0 0.0
        %732 = vmatpush1.xpose.msra.mxu0 0.0
        %733 = vmatprep.subr.mxu0 0.0
        %734 = vmatpush1.xpose.msra.mxu0 0.0
        %735 = vmatprep.subr.mxu0 0.0
        %736 = vmatpush1.xpose.msra.mxu0 0.0
        %737 = vmatprep.subr.mxu0 0.0
        %738 = vmatpush1.xpose.msra.mxu0 0.0
        %739 = vmatprep.subr.mxu0 0.0
        %740 = vmatpush1.xpose.msra.mxu0 0.0
        %741 = vmatprep.mubr.f32.mxu0 0.0
        %742 = vmatmul.mubr.f32.gmra.mrb[0].mxu0 %v672
        %v743 = vpop.f32.mrb[0].mxu0
        %v744 = vadd.f32 0.0, %v743
        %v745 = vpop.f32.mrb[0].mxu0
        %746 = vdwg.mxu0
        %v748 = vsel %vm290, %v280, 0
        %v751 = vsel %vm290, %v288, 0
        %753 = vmatprep.subr.mxu0 0.0
        %754 = vmatpush1.xpose.msra.mxu0 %v751
        %755 = vmatprep.subr.mxu0 0.0
        %756 = vmatpush1.xpose.msra.mxu0 0.0
        %757 = vmatprep.subr.mxu0 0.0
        %758 = vmatpush1.xpose.msra.mxu0 0.0
        %759 = vmatprep.subr.mxu0 0.0
        %760 = vmatpush1.xpose.msra.mxu0 0.0
        %761 = vmatprep.subr.mxu0 0.0
        %762 = vmatpush1.xpose.msra.mxu0 0.0
        %763 = vmatprep.subr.mxu0 0.0
        %764 = vmatpush1.xpose.msra.mxu0 0.0
        %765 = vmatprep.subr.mxu0 0.0
        %766 = vmatpush1.xpose.msra.mxu0 0.0
        %767 = vmatprep.subr.mxu0 0.0
        %768 = vmatpush1.xpose.msra.mxu0 0.0
        %769 = vmatprep.subr.mxu0 0.0
        %770 = vmatpush1.xpose.msra.mxu0 0.0
        %771 = vmatprep.subr.mxu0 0.0
        %772 = vmatpush1.xpose.msra.mxu0 0.0
        %773 = vmatprep.subr.mxu0 0.0
        %774 = vmatpush1.xpose.msra.mxu0 0.0
        %775 = vmatprep.subr.mxu0 0.0
        %776 = vmatpush1.xpose.msra.mxu0 0.0
        %777 = vmatprep.subr.mxu0 0.0
        %778 = vmatpush1.xpose.msra.mxu0 0.0
        %779 = vmatprep.subr.mxu0 0.0
        %780 = vmatpush1.xpose.msra.mxu0 0.0
        %781 = vmatprep.subr.mxu0 0.0
        %782 = vmatpush1.xpose.msra.mxu0 0.0
        %783 = vmatprep.subr.mxu0 0.0
        %784 = vmatpush1.xpose.msra.mxu0 0.0
        %785 = vmatprep.subr.mxu0 0.0
        %786 = vmatpush1.xpose.msra.mxu0 0.0
        %787 = vmatprep.subr.mxu0 0.0
        %788 = vmatpush1.xpose.msra.mxu0 0.0
        %789 = vmatprep.subr.mxu0 0.0
        %790 = vmatpush1.xpose.msra.mxu0 0.0
        %791 = vmatprep.subr.mxu0 0.0
        %792 = vmatpush1.xpose.msra.mxu0 0.0
        %793 = vmatprep.subr.mxu0 0.0
        %794 = vmatpush1.xpose.msra.mxu0 0.0
        %795 = vmatprep.subr.mxu0 0.0
        %796 = vmatpush1.xpose.msra.mxu0 0.0
        %797 = vmatprep.subr.mxu0 0.0
        %798 = vmatpush1.xpose.msra.mxu0 0.0
        %799 = vmatprep.subr.mxu0 0.0
        %800 = vmatpush1.xpose.msra.mxu0 0.0
        %801 = vmatprep.subr.mxu0 0.0
        %802 = vmatpush1.xpose.msra.mxu0 0.0
        %803 = vmatprep.subr.mxu0 0.0
        %804 = vmatpush1.xpose.msra.mxu0 0.0
        %805 = vmatprep.subr.mxu0 0.0
        %806 = vmatpush1.xpose.msra.mxu0 0.0
        %807 = vmatprep.subr.mxu0 0.0
        %808 = vmatpush1.xpose.msra.mxu0 0.0
        %809 = vmatprep.subr.mxu0 0.0
        %810 = vmatpush1.xpose.msra.mxu0 0.0
        %811 = vmatprep.subr.mxu0 0.0
        %812 = vmatpush1.xpose.msra.mxu0 0.0
        %813 = vmatprep.subr.mxu0 0.0
        %814 = vmatpush1.xpose.msra.mxu0 0.0
        %815 = vmatprep.subr.mxu0 0.0
        %816 = vmatpush1.xpose.msra.mxu0 0.0
        %817 = vmatprep.mubr.f32.mxu0 0.0
        %818 = vmatmul.mubr.f32.gmra.mrb[0].mxu0 %v748
        %v819 = vpop.f32.mrb[0].mxu0
        %v820 = vadd.f32 0.0, %v819
        %v821 = vpop.f32.mrb[0].mxu0
        %822 = vdwg.mxu0
        %v824 = vsel %vm290, %v281, 0
        %v827 = vsel %vm290, %v289, 0
        %829 = vmatprep.subr.mxu0 0.0
        %830 = vmatpush1.xpose.msra.mxu0 %v827
        %831 = vmatprep.subr.mxu0 0.0
        %832 = vmatpush1.xpose.msra.mxu0 0.0
        %833 = vmatprep.subr.mxu0 0.0
        %834 = vmatpush1.xpose.msra.mxu0 0.0
        %835 = vmatprep.subr.mxu0 0.0
        %836 = vmatpush1.xpose.msra.mxu0 0.0
        %837 = vmatprep.subr.mxu0 0.0
        %838 = vmatpush1.xpose.msra.mxu0 0.0
        %839 = vmatprep.subr.mxu0 0.0
        %840 = vmatpush1.xpose.msra.mxu0 0.0
        %841 = vmatprep.subr.mxu0 0.0
        %842 = vmatpush1.xpose.msra.mxu0 0.0
        %843 = vmatprep.subr.mxu0 0.0
        %844 = vmatpush1.xpose.msra.mxu0 0.0
        %845 = vmatprep.subr.mxu0 0.0
        %846 = vmatpush1.xpose.msra.mxu0 0.0
        %847 = vmatprep.subr.mxu0 0.0
        %848 = vmatpush1.xpose.msra.mxu0 0.0
        %849 = vmatprep.subr.mxu0 0.0
        %850 = vmatpush1.xpose.msra.mxu0 0.0
        %851 = vmatprep.subr.mxu0 0.0
        %852 = vmatpush1.xpose.msra.mxu0 0.0
        %853 = vmatprep.subr.mxu0 0.0
        %854 = vmatpush1.xpose.msra.mxu0 0.0
        %855 = vmatprep.subr.mxu0 0.0
        %856 = vmatpush1.xpose.msra.mxu0 0.0
        %857 = vmatprep.subr.mxu0 0.0
        %858 = vmatpush1.xpose.msra.mxu0 0.0
        %859 = vmatprep.subr.mxu0 0.0
        %860 = vmatpush1.xpose.msra.mxu0 0.0
        %861 = vmatprep.subr.mxu0 0.0
        %862 = vmatpush1.xpose.msra.mxu0 0.0
        %863 = vmatprep.subr.mxu0 0.0
        %864 = vmatpush1.xpose.msra.mxu0 0.0
        %865 = vmatprep.subr.mxu0 0.0
        %866 = vmatpush1.xpose.msra.mxu0 0.0
        %867 = vmatprep.subr.mxu0 0.0
        %868 = vmatpush1.xpose.msra.mxu0 0.0
        %869 = vmatprep.subr.mxu0 0.0
        %870 = vmatpush1.xpose.msra.mxu0 0.0
        %871 = vmatprep.subr.mxu0 0.0
        %872 = vmatpush1.xpose.msra.mxu0 0.0
        %873 = vmatprep.subr.mxu0 0.0
        %874 = vmatpush1.xpose.msra.mxu0 0.0
        %875 = vmatprep.subr.mxu0 0.0
        %876 = vmatpush1.xpose.msra.mxu0 0.0
        %877 = vmatprep.subr.mxu0 0.0
        %878 = vmatpush1.xpose.msra.mxu0 0.0
        %879 = vmatprep.subr.mxu0 0.0
        %880 = vmatpush1.xpose.msra.mxu0 0.0
        %881 = vmatprep.subr.mxu0 0.0
        %882 = vmatpush1.xpose.msra.mxu0 0.0
        %883 = vmatprep.subr.mxu0 0.0
        %884 = vmatpush1.xpose.msra.mxu0 0.0
        %885 = vmatprep.subr.mxu0 0.0
        %886 = vmatpush1.xpose.msra.mxu0 0.0
        %887 = vmatprep.subr.mxu0 0.0
        %888 = vmatpush1.xpose.msra.mxu0 0.0
        %889 = vmatprep.subr.mxu0 0.0
        %890 = vmatpush1.xpose.msra.mxu0 0.0
        %891 = vmatprep.subr.mxu0 0.0
        %892 = vmatpush1.xpose.msra.mxu0 0.0
        %893 = vmatprep.mubr.f32.mxu0 0.0
        %894 = vmatmul.mubr.f32.gmra.mrb[0].mxu0 %v824
        %v895 = vpop.f32.mrb[0].mxu0
        %v896 = vadd.f32 0.0, %v895
        %v897 = vpop.f32.mrb[0].mxu0
        %898 = vdwg.mxu0
        %vm899 = vcmask 64512
        %v900 = vsel %vm899, %v364, -inf
        %901 = vmax.xlane.f32.xlu0 %v900
        %v902 = vpop.xlane.xlu0 %901
        %v903 = vsel %vm899, %v440, -inf
        %904 = vmax.xlane.f32.xlu0 %v903
        %v905 = vpop.xlane.xlu0 %904
        %v906 = vsel %vm899, %v516, -inf
        %907 = vmax.xlane.f32.xlu0 %v906
        %v908 = vpop.xlane.xlu0 %907
        %v909 = vsel %vm899, %v592, -inf
        %910 = vmax.xlane.f32.xlu0 %v909
        %v911 = vpop.xlane.xlu0 %910
        %v912 = vsel %vm899, %v668, -inf
        %913 = vmax.xlane.f32.xlu0 %v912
        %v914 = vpop.xlane.xlu0 %913
        %v915 = vsel %vm899, %v744, -inf
        %916 = vmax.xlane.f32.xlu0 %v915
        %v917 = vpop.xlane.xlu0 %916
        %v918 = vsel %vm899, %v820, -inf
        %919 = vmax.xlane.f32.xlu0 %v918
        %v920 = vpop.xlane.xlu0 %919
        %v921 = vsel %vm899, %v896, -inf
        %922 = vmax.xlane.f32.xlu0 %v921
        %v923 = vpop.xlane.xlu0 %922
        %v924 = vsub.f32 %v364, %v902
        %v925 = vsub.f32 %v440, %v905
        %v926 = vsub.f32 %v516, %v908
        %v927 = vsub.f32 %v592, %v911
        %v928 = vsub.f32 %v668, %v914
        %v929 = vsub.f32 %v744, %v917
        %v930 = vsub.f32 %v820, %v920
        %v931 = vsub.f32 %v896, %v923
        %v932 = vmul.f32 %v924, 1.442695
        %v933 = vpow.pop %v932
        %v934 = vmul.f32 %v925, 1.442695
        %v935 = vpow.pop %v934
        %v936 = vmul.f32 %v926, 1.442695
        %v937 = vpow.pop %v936
        %v938 = vmul.f32 %v927, 1.442695
        %v939 = vpow.pop %v938
        %v940 = vmul.f32 %v928, 1.442695
        %v941 = vpow.pop %v940
        %v942 = vmul.f32 %v929, 1.442695
        %v943 = vpow.pop %v942
        %v944 = vmul.f32 %v930, 1.442695
        %v945 = vpow.pop %v944
        %v946 = vmul.f32 %v931, 1.442695
        %v947 = vpow.pop %v946
        %v948 = vsel %vm899, %v933, 0.0
        %949 = vadd.xlane.f32.xlu0 %v948
        %v950 = vpop.xlane.xlu0 %949
        %v951 = vsel %vm899, %v935, 0.0
        %952 = vadd.xlane.f32.xlu0 %v951
        %v953 = vpop.xlane.xlu0 %952
        %v954 = vsel %vm899, %v937, 0.0
        %955 = vadd.xlane.f32.xlu0 %v954
        %v956 = vpop.xlane.xlu0 %955
        %v957 = vsel %vm899, %v939, 0.0
        %958 = vadd.xlane.f32.xlu0 %v957
        %v959 = vpop.xlane.xlu0 %958
        %v960 = vsel %vm899, %v941, 0.0
        %961 = vadd.xlane.f32.xlu0 %v960
        %v962 = vpop.xlane.xlu0 %961
        %v963 = vsel %vm899, %v943, 0.0
        %964 = vadd.xlane.f32.xlu0 %v963
        %v965 = vpop.xlane.xlu0 %964
        %v966 = vsel %vm899, %v945, 0.0
        %967 = vadd.xlane.f32.xlu0 %v966
        %v968 = vpop.xlane.xlu0 %967
        %v969 = vsel %vm899, %v947, 0.0
        %970 = vadd.xlane.f32.xlu0 %v969
        %v971 = vpop.xlane.xlu0 %970
        %v972 = vrcp.pop %v950
        %v973 = vrcp.pop %v953
        %v974 = vrcp.pop %v956
        %v975 = vrcp.pop %v959
        %v976 = vrcp.pop %v962
        %v977 = vrcp.pop %v965
        %v978 = vrcp.pop %v968
        %v979 = vrcp.pop %v971
        %v980 = vld [vmem:[%s233] sm:$0xff]
        %v981 = vld [vmem:[%s233 + $0x8] sm:$0xff]
        %v982 = vld [vmem:[%s233 + $0x10] sm:$0xff]
        %v983 = vld [vmem:[%s233 + $0x18] sm:$0xff]
        %v984 = vld [vmem:[%s233 + $0x20] sm:$0xff]
        %v985 = vld [vmem:[%s233 + $0x28] sm:$0xff]
        %v986 = vld [vmem:[%s233 + $0x30] sm:$0xff]
        %v987 = vld [vmem:[%s233 + $0x38] sm:$0xff]
        %v988 = vcombine.low %v980, %v982
        %v989 = vcombine.high %v980, %v982
        %v991 = vunpack.c.l.s4 1983009808
        %v992 = vunpack.c.0.s8 %v991
        %v993 = vlaneseq
        %v994 = vshrl.u32 %v993, 7
        %v995 = vsub.s32 %v992, %v994
        %v996 = vrot.slane %v988, %v995
        %v998 = vunpack.c.l.s4 1983009808
        %v999 = vunpack.c.0.s8 %v998
        %v1000 = vlaneseq
        %v1001 = vshrl.u32 %v1000, 7
        %v1002 = vsub.s32 %v999, %v1001
        %v1003 = vrot.slane %v989, %v1002
        %v1004 = vcombine.low %v981, %v983
        %v1005 = vcombine.high %v981, %v983
        %v1007 = vunpack.c.l.s4 1983009808
        %v1008 = vunpack.c.0.s8 %v1007
        %v1009 = vlaneseq
        %v1010 = vshrl.u32 %v1009, 7
        %v1011 = vsub.s32 %v1008, %v1010
        %v1012 = vrot.slane %v1004, %v1011
        %v1014 = vunpack.c.l.s4 1983009808
        %v1015 = vunpack.c.0.s8 %v1014
        %v1016 = vlaneseq
        %v1017 = vshrl.u32 %v1016, 7
        %v1018 = vsub.s32 %v1015, %v1017
        %v1019 = vrot.slane %v1005, %v1018
        %v1020 = vcombine.low %v984, %v986
        %v1021 = vcombine.high %v984, %v986
        %v1023 = vunpack.c.l.s4 1983009808
        %v1024 = vunpack.c.0.s8 %v1023
        %v1025 = vlaneseq
        %v1026 = vshrl.u32 %v1025, 7
        %v1027 = vsub.s32 %v1024, %v1026
        %v1028 = vrot.slane %v1020, %v1027
        %v1030 = vunpack.c.l.s4 1983009808
        %v1031 = vunpack.c.0.s8 %v1030
        %v1032 = vlaneseq
        %v1033 = vshrl.u32 %v1032, 7
        %v1034 = vsub.s32 %v1031, %v1033
        %v1035 = vrot.slane %v1021, %v1034
        %v1036 = vcombine.low %v985, %v987
        %v1037 = vcombine.high %v985, %v987
        %v1039 = vunpack.c.l.s4 1983009808
        %v1040 = vunpack.c.0.s8 %v1039
        %v1041 = vlaneseq
        %v1042 = vshrl.u32 %v1041, 7
        %v1043 = vsub.s32 %v1040, %v1042
        %v1044 = vrot.slane %v1036, %v1043
        %v1046 = vunpack.c.l.s4 1983009808
        %v1047 = vunpack.c.0.s8 %v1046
        %v1048 = vlaneseq
        %v1049 = vshrl.u32 %v1048, 7
        %v1050 = vsub.s32 %v1047, %v1049
        %v1051 = vrot.slane %v1037, %v1050
        %v1052 = vcombine.low %v996, %v1012
        %v1053 = vcombine.high %v996, %v1012
        %v1055 = vunpack.c.l.s4 1934713408
        %v1056 = vunpack.c.0.s8 %v1055
        %v1057 = vlaneseq
        %v1058 = vshrl.u32 %v1057, 7
        %v1059 = vsub.s32 %v1056, %v1058
        %v1060 = vrot.slane %v1052, %v1059
        %v1062 = vunpack.c.l.s4 1934713408
        %v1063 = vunpack.c.0.s8 %v1062
        %v1064 = vlaneseq
        %v1065 = vshrl.u32 %v1064, 7
        %v1066 = vsub.s32 %v1063, %v1065
        %v1067 = vrot.slane %v1053, %v1066
        %v1068 = vcombine.low %v1003, %v1019
        %v1069 = vcombine.high %v1003, %v1019
        %v1071 = vunpack.c.l.s4 1934713408
        %v1072 = vunpack.c.0.s8 %v1071
        %v1073 = vlaneseq
        %v1074 = vshrl.u32 %v1073, 7
        %v1075 = vsub.s32 %v1072, %v1074
        %v1076 = vrot.slane %v1068, %v1075
        %v1078 = vunpack.c.l.s4 1934713408
        %v1079 = vunpack.c.0.s8 %v1078
        %v1080 = vlaneseq
        %v1081 = vshrl.u32 %v1080, 7
        %v1082 = vsub.s32 %v1079, %v1081
        %v1083 = vrot.slane %v1069, %v1082
        %v1084 = vcombine.low %v1028, %v1044
        %v1085 = vcombine.high %v1028, %v1044
        %v1087 = vunpack.c.l.s4 1934713408
        %v1088 = vunpack.c.0.s8 %v1087
        %v1089 = vlaneseq
        %v1090 = vshrl.u32 %v1089, 7
        %v1091 = vsub.s32 %v1088, %v1090
        %v1092 = vrot.slane %v1084, %v1091
        %v1094 = vunpack.c.l.s4 1934713408
        %v1095 = vunpack.c.0.s8 %v1094
        %v1096 = vlaneseq
        %v1097 = vshrl.u32 %v1096, 7
        %v1098 = vsub.s32 %v1095, %v1097
        %v1099 = vrot.slane %v1085, %v1098
        %v1100 = vcombine.low %v1035, %v1051
        %v1101 = vcombine.high %v1035, %v1051
        %v1103 = vunpack.c.l.s4 1934713408
        %v1104 = vunpack.c.0.s8 %v1103
        %v1105 = vlaneseq
        %v1106 = vshrl.u32 %v1105, 7
        %v1107 = vsub.s32 %v1104, %v1106
        %v1108 = vrot.slane %v1100, %v1107
        %v1110 = vunpack.c.l.s4 1934713408
        %v1111 = vunpack.c.0.s8 %v1110
        %v1112 = vlaneseq
        %v1113 = vshrl.u32 %v1112, 7
        %v1114 = vsub.s32 %v1111, %v1113
        %v1115 = vrot.slane %v1101, %v1114
        %v1116 = vcombine.low %v1060, %v1092
        %v1117 = vcombine.high %v1060, %v1092
        %v1118 = vcombine.low %v1067, %v1099
        %v1119 = vcombine.high %v1067, %v1099
        %v1120 = vcombine.low %v1076, %v1108
        %v1121 = vcombine.high %v1076, %v1108
        %v1122 = vcombine.low %v1083, %v1115
        %v1123 = vcombine.high %v1083, %v1115
        %v1125 = vsel %vm899, %v933, 0
        %1127 = vmatprep.subr.mxu0 0.0
        %1128 = vmatpush1.msra.mxu0 %v1116
        %1129 = vmatprep.subr.mxu0 0.0
        %1130 = vmatpush1.msra.mxu0 0.0
        %1131 = vmatprep.subr.mxu0 0.0
        %1132 = vmatpush1.msra.mxu0 0.0
        %1133 = vmatprep.subr.mxu0 0.0
        %1134 = vmatpush1.msra.mxu0 0.0
        %1135 = vmatprep.subr.mxu0 0.0
        %1136 = vmatpush1.msra.mxu0 0.0
        %1137 = vmatprep.subr.mxu0 0.0
        %1138 = vmatpush1.msra.mxu0 0.0
        %1139 = vmatprep.subr.mxu0 0.0
        %1140 = vmatpush1.msra.mxu0 0.0
        %1141 = vmatprep.subr.mxu0 0.0
        %1142 = vmatpush1.msra.mxu0 0.0
        %1143 = vmatprep.subr.mxu0 0.0
        %1144 = vmatpush1.msra.mxu0 0.0
        %1145 = vmatprep.subr.mxu0 0.0
        %1146 = vmatpush1.msra.mxu0 0.0
        %1147 = vmatprep.subr.mxu0 0.0
        %1148 = vmatpush1.msra.mxu0 0.0
        %1149 = vmatprep.subr.mxu0 0.0
        %1150 = vmatpush1.msra.mxu0 0.0
        %1151 = vmatprep.subr.mxu0 0.0
        %1152 = vmatpush1.msra.mxu0 0.0
        %1153 = vmatprep.subr.mxu0 0.0
        %1154 = vmatpush1.msra.mxu0 0.0
        %1155 = vmatprep.subr.mxu0 0.0
        %1156 = vmatpush1.msra.mxu0 0.0
        %1157 = vmatprep.subr.mxu0 0.0
        %1158 = vmatpush1.msra.mxu0 0.0
        %1159 = vmatprep.subr.mxu0 0.0
        %1160 = vmatpush1.msra.mxu0 0.0
        %1161 = vmatprep.subr.mxu0 0.0
        %1162 = vmatpush1.msra.mxu0 0.0
        %1163 = vmatprep.subr.mxu0 0.0
        %1164 = vmatpush1.msra.mxu0 0.0
        %1165 = vmatprep.subr.mxu0 0.0
        %1166 = vmatpush1.msra.mxu0 0.0
        %1167 = vmatprep.subr.mxu0 0.0
        %1168 = vmatpush1.msra.mxu0 0.0
        %1169 = vmatprep.subr.mxu0 0.0
        %1170 = vmatpush1.msra.mxu0 0.0
        %1171 = vmatprep.subr.mxu0 0.0
        %1172 = vmatpush1.msra.mxu0 0.0
        %1173 = vmatprep.subr.mxu0 0.0
        %1174 = vmatpush1.msra.mxu0 0.0
        %1175 = vmatprep.subr.mxu0 0.0
        %1176 = vmatpush1.msra.mxu0 0.0
        %1177 = vmatprep.subr.mxu0 0.0
        %1178 = vmatpush1.msra.mxu0 0.0
        %1179 = vmatprep.subr.mxu0 0.0
        %1180 = vmatpush1.msra.mxu0 0.0
        %1181 = vmatprep.subr.mxu0 0.0
        %1182 = vmatpush1.msra.mxu0 0.0
        %1183 = vmatprep.subr.mxu0 0.0
        %1184 = vmatpush1.msra.mxu0 0.0
        %1185 = vmatprep.subr.mxu0 0.0
        %1186 = vmatpush1.msra.mxu0 0.0
        %1187 = vmatprep.subr.mxu0 0.0
        %1188 = vmatpush1.msra.mxu0 0.0
        %1189 = vmatprep.subr.mxu0 0.0
        %1190 = vmatpush1.msra.mxu0 0.0
        %1191 = vmatprep.mubr.f32.mxu0 0.0
        %1192 = vmatmul.mubr.f32.gmra.mrb[0].mxu0 %v1125
        %v1193 = vpop.f32.mrb[0].mxu0
        %v1194 = vadd.f32 0.0, %v1193
        %v1195 = vpop.f32.mrb[0].mxu0
        %1196 = vdwg.mxu0
        %v1198 = vsel %vm899, %v935, 0
        %1200 = vmatprep.subr.mxu0 0.0
        %1201 = vmatpush1.msra.mxu0 %v1117
        %1202 = vmatprep.subr.mxu0 0.0
        %1203 = vmatpush1.msra.mxu0 0.0
        %1204 = vmatprep.subr.mxu0 0.0
        %1205 = vmatpush1.msra.mxu0 0.0
        %1206 = vmatprep.subr.mxu0 0.0
        %1207 = vmatpush1.msra.mxu0 0.0
        %1208 = vmatprep.subr.mxu0 0.0
        %1209 = vmatpush1.msra.mxu0 0.0
        %1210 = vmatprep.subr.mxu0 0.0
        %1211 = vmatpush1.msra.mxu0 0.0
        %1212 = vmatprep.subr.mxu0 0.0
        %1213 = vmatpush1.msra.mxu0 0.0
        %1214 = vmatprep.subr.mxu0 0.0
        %1215 = vmatpush1.msra.mxu0 0.0
        %1216 = vmatprep.subr.mxu0 0.0
        %1217 = vmatpush1.msra.mxu0 0.0
        %1218 = vmatprep.subr.mxu0 0.0
        %1219 = vmatpush1.msra.mxu0 0.0
        %1220 = vmatprep.subr.mxu0 0.0
        %1221 = vmatpush1.msra.mxu0 0.0
        %1222 = vmatprep.subr.mxu0 0.0
        %1223 = vmatpush1.msra.mxu0 0.0
        %1224 = vmatprep.subr.mxu0 0.0
        %1225 = vmatpush1.msra.mxu0 0.0
        %1226 = vmatprep.subr.mxu0 0.0
        %1227 = vmatpush1.msra.mxu0 0.0
        %1228 = vmatprep.subr.mxu0 0.0
        %1229 = vmatpush1.msra.mxu0 0.0
        %1230 = vmatprep.subr.mxu0 0.0
        %1231 = vmatpush1.msra.mxu0 0.0
        %1232 = vmatprep.subr.mxu0 0.0
        %1233 = vmatpush1.msra.mxu0 0.0
        %1234 = vmatprep.subr.mxu0 0.0
        %1235 = vmatpush1.msra.mxu0 0.0
        %1236 = vmatprep.subr.mxu0 0.0
        %1237 = vmatpush1.msra.mxu0 0.0
        %1238 = vmatprep.subr.mxu0 0.0
        %1239 = vmatpush1.msra.mxu0 0.0
        %1240 = vmatprep.subr.mxu0 0.0
        %1241 = vmatpush1.msra.mxu0 0.0
        %1242 = vmatprep.subr.mxu0 0.0
        %1243 = vmatpush1.msra.mxu0 0.0
        %1244 = vmatprep.subr.mxu0 0.0
        %1245 = vmatpush1.msra.mxu0 0.0
        %1246 = vmatprep.subr.mxu0 0.0
        %1247 = vmatpush1.msra.mxu0 0.0
        %1248 = vmatprep.subr.mxu0 0.0
        %1249 = vmatpush1.msra.mxu0 0.0
        %1250 = vmatprep.subr.mxu0 0.0
        %1251 = vmatpush1.msra.mxu0 0.0
        %1252 = vmatprep.subr.mxu0 0.0
        %1253 = vmatpush1.msra.mxu0 0.0
        %1254 = vmatprep.subr.mxu0 0.0
        %1255 = vmatpush1.msra.mxu0 0.0
        %1256 = vmatprep.subr.mxu0 0.0
        %1257 = vmatpush1.msra.mxu0 0.0
        %1258 = vmatprep.subr.mxu0 0.0
        %1259 = vmatpush1.msra.mxu0 0.0
        %1260 = vmatprep.subr.mxu0 0.0
        %1261 = vmatpush1.msra.mxu0 0.0
        %1262 = vmatprep.subr.mxu0 0.0
        %1263 = vmatpush1.msra.mxu0 0.0
        %1264 = vmatprep.mubr.f32.mxu0 0.0
        %1265 = vmatmul.mubr.f32.gmra.mrb[0].mxu0 %v1198
        %v1266 = vpop.f32.mrb[0].mxu0
        %v1267 = vadd.f32 0.0, %v1266
        %v1268 = vpop.f32.mrb[0].mxu0
        %1269 = vdwg.mxu0
        %v1271 = vsel %vm899, %v937, 0
        %1273 = vmatprep.subr.mxu0 0.0
        %1274 = vmatpush1.msra.mxu0 %v1118
        %1275 = vmatprep.subr.mxu0 0.0
        %1276 = vmatpush1.msra.mxu0 0.0
        %1277 = vmatprep.subr.mxu0 0.0
        %1278 = vmatpush1.msra.mxu0 0.0
        %1279 = vmatprep.subr.mxu0 0.0
        %1280 = vmatpush1.msra.mxu0 0.0
        %1281 = vmatprep.subr.mxu0 0.0
        %1282 = vmatpush1.msra.mxu0 0.0
        %1283 = vmatprep.subr.mxu0 0.0
        %1284 = vmatpush1.msra.mxu0 0.0
        %1285 = vmatprep.subr.mxu0 0.0
        %1286 = vmatpush1.msra.mxu0 0.0
        %1287 = vmatprep.subr.mxu0 0.0
        %1288 = vmatpush1.msra.mxu0 0.0
        %1289 = vmatprep.subr.mxu0 0.0
        %1290 = vmatpush1.msra.mxu0 0.0
        %1291 = vmatprep.subr.mxu0 0.0
        %1292 = vmatpush1.msra.mxu0 0.0
        %1293 = vmatprep.subr.mxu0 0.0
        %1294 = vmatpush1.msra.mxu0 0.0
        %1295 = vmatprep.subr.mxu0 0.0
        %1296 = vmatpush1.msra.mxu0 0.0
        %1297 = vmatprep.subr.mxu0 0.0
        %1298 = vmatpush1.msra.mxu0 0.0
        %1299 = vmatprep.subr.mxu0 0.0
        %1300 = vmatpush1.msra.mxu0 0.0
        %1301 = vmatprep.subr.mxu0 0.0
        %1302 = vmatpush1.msra.mxu0 0.0
        %1303 = vmatprep.subr.mxu0 0.0
        %1304 = vmatpush1.msra.mxu0 0.0
        %1305 = vmatprep.subr.mxu0 0.0
        %1306 = vmatpush1.msra.mxu0 0.0
        %1307 = vmatprep.subr.mxu0 0.0
        %1308 = vmatpush1.msra.mxu0 0.0
        %1309 = vmatprep.subr.mxu0 0.0
        %1310 = vmatpush1.msra.mxu0 0.0
        %1311 = vmatprep.subr.mxu0 0.0
        %1312 = vmatpush1.msra.mxu0 0.0
        %1313 = vmatprep.subr.mxu0 0.0
        %1314 = vmatpush1.msra.mxu0 0.0
        %1315 = vmatprep.subr.mxu0 0.0
        %1316 = vmatpush1.msra.mxu0 0.0
        %1317 = vmatprep.subr.mxu0 0.0
        %1318 = vmatpush1.msra.mxu0 0.0
        %1319 = vmatprep.subr.mxu0 0.0
        %1320 = vmatpush1.msra.mxu0 0.0
        %1321 = vmatprep.subr.mxu0 0.0
        %1322 = vmatpush1.msra.mxu0 0.0
        %1323 = vmatprep.subr.mxu0 0.0
        %1324 = vmatpush1.msra.mxu0 0.0
        %1325 = vmatprep.subr.mxu0 0.0
        %1326 = vmatpush1.msra.mxu0 0.0
        %1327 = vmatprep.subr.mxu0 0.0
        %1328 = vmatpush1.msra.mxu0 0.0
        %1329 = vmatprep.subr.mxu0 0.0
        %1330 = vmatpush1.msra.mxu0 0.0
        %1331 = vmatprep.subr.mxu0 0.0
        %1332 = vmatpush1.msra.mxu0 0.0
        %1333 = vmatprep.subr.mxu0 0.0
        %1334 = vmatpush1.msra.mxu0 0.0
        %1335 = vmatprep.subr.mxu0 0.0
        %1336 = vmatpush1.msra.mxu0 0.0
        %1337 = vmatprep.mubr.f32.mxu0 0.0
        %1338 = vmatmul.mubr.f32.gmra.mrb[0].mxu0 %v1271
        %v1339 = vpop.f32.mrb[0].mxu0
        %v1340 = vadd.f32 0.0, %v1339
        %v1341 = vpop.f32.mrb[0].mxu0
        %1342 = vdwg.mxu0
        %v1344 = vsel %vm899, %v939, 0
        %1346 = vmatprep.subr.mxu0 0.0
        %1347 = vmatpush1.msra.mxu0 %v1119
        %1348 = vmatprep.subr.mxu0 0.0
        %1349 = vmatpush1.msra.mxu0 0.0
        %1350 = vmatprep.subr.mxu0 0.0
        %1351 = vmatpush1.msra.mxu0 0.0
        %1352 = vmatprep.subr.mxu0 0.0
        %1353 = vmatpush1.msra.mxu0 0.0
        %1354 = vmatprep.subr.mxu0 0.0
        %1355 = vmatpush1.msra.mxu0 0.0
        %1356 = vmatprep.subr.mxu0 0.0
        %1357 = vmatpush1.msra.mxu0 0.0
        %1358 = vmatprep.subr.mxu0 0.0
        %1359 = vmatpush1.msra.mxu0 0.0
        %1360 = vmatprep.subr.mxu0 0.0
        %1361 = vmatpush1.msra.mxu0 0.0
        %1362 = vmatprep.subr.mxu0 0.0
        %1363 = vmatpush1.msra.mxu0 0.0
        %1364 = vmatprep.subr.mxu0 0.0
        %1365 = vmatpush1.msra.mxu0 0.0
        %1366 = vmatprep.subr.mxu0 0.0
        %1367 = vmatpush1.msra.mxu0 0.0
        %1368 = vmatprep.subr.mxu0 0.0
        %1369 = vmatpush1.msra.mxu0 0.0
        %1370 = vmatprep.subr.mxu0 0.0
        %1371 = vmatpush1.msra.mxu0 0.0
        %1372 = vmatprep.subr.mxu0 0.0
        %1373 = vmatpush1.msra.mxu0 0.0
        %1374 = vmatprep.subr.mxu0 0.0
        %1375 = vmatpush1.msra.mxu0 0.0
        %1376 = vmatprep.subr.mxu0 0.0
        %1377 = vmatpush1.msra.mxu0 0.0
        %1378 = vmatprep.subr.mxu0 0.0
        %1379 = vmatpush1.msra.mxu0 0.0
        %1380 = vmatprep.subr.mxu0 0.0
        %1381 = vmatpush1.msra.mxu0 0.0
        %1382 = vmatprep.subr.mxu0 0.0
        %1383 = vmatpush1.msra.mxu0 0.0
        %1384 = vmatprep.subr.mxu0 0.0
        %1385 = vmatpush1.msra.mxu0 0.0
        %1386 = vmatprep.subr.mxu0 0.0
        %1387 = vmatpush1.msra.mxu0 0.0
        %1388 = vmatprep.subr.mxu0 0.0
        %1389 = vmatpush1.msra.mxu0 0.0
        %1390 = vmatprep.subr.mxu0 0.0
        %1391 = vmatpush1.msra.mxu0 0.0
        %1392 = vmatprep.subr.mxu0 0.0
        %1393 = vmatpush1.msra.mxu0 0.0
        %1394 = vmatprep.subr.mxu0 0.0
        %1395 = vmatpush1.msra.mxu0 0.0
        %1396 = vmatprep.subr.mxu0 0.0
        %1397 = vmatpush1.msra.mxu0 0.0
        %1398 = vmatprep.subr.mxu0 0.0
        %1399 = vmatpush1.msra.mxu0 0.0
        %1400 = vmatprep.subr.mxu0 0.0
        %1401 = vmatpush1.msra.mxu0 0.0
        %1402 = vmatprep.subr.mxu0 0.0
        %1403 = vmatpush1.msra.mxu0 0.0
        %1404 = vmatprep.subr.mxu0 0.0
        %1405 = vmatpush1.msra.mxu0 0.0
        %1406 = vmatprep.subr.mxu0 0.0
        %1407 = vmatpush1.msra.mxu0 0.0
        %1408 = vmatprep.subr.mxu0 0.0
        %1409 = vmatpush1.msra.mxu0 0.0
        %1410 = vmatprep.mubr.f32.mxu0 0.0
        %1411 = vmatmul.mubr.f32.gmra.mrb[0].mxu0 %v1344
        %v1412 = vpop.f32.mrb[0].mxu0
        %v1413 = vadd.f32 0.0, %v1412
        %v1414 = vpop.f32.mrb[0].mxu0
        %1415 = vdwg.mxu0
        %v1417 = vsel %vm899, %v941, 0
        %1419 = vmatprep.subr.mxu0 0.0
        %1420 = vmatpush1.msra.mxu0 %v1120
        %1421 = vmatprep.subr.mxu0 0.0
        %1422 = vmatpush1.msra.mxu0 0.0
        %1423 = vmatprep.subr.mxu0 0.0
        %1424 = vmatpush1.msra.mxu0 0.0
        %1425 = vmatprep.subr.mxu0 0.0
        %1426 = vmatpush1.msra.mxu0 0.0
        %1427 = vmatprep.subr.mxu0 0.0
        %1428 = vmatpush1.msra.mxu0 0.0
        %1429 = vmatprep.subr.mxu0 0.0
        %1430 = vmatpush1.msra.mxu0 0.0
        %1431 = vmatprep.subr.mxu0 0.0
        %1432 = vmatpush1.msra.mxu0 0.0
        %1433 = vmatprep.subr.mxu0 0.0
        %1434 = vmatpush1.msra.mxu0 0.0
        %1435 = vmatprep.subr.mxu0 0.0
        %1436 = vmatpush1.msra.mxu0 0.0
        %1437 = vmatprep.subr.mxu0 0.0
        %1438 = vmatpush1.msra.mxu0 0.0
        %1439 = vmatprep.subr.mxu0 0.0
        %1440 = vmatpush1.msra.mxu0 0.0
        %1441 = vmatprep.subr.mxu0 0.0
        %1442 = vmatpush1.msra.mxu0 0.0
        %1443 = vmatprep.subr.mxu0 0.0
        %1444 = vmatpush1.msra.mxu0 0.0
        %1445 = vmatprep.subr.mxu0 0.0
        %1446 = vmatpush1.msra.mxu0 0.0
        %1447 = vmatprep.subr.mxu0 0.0
        %1448 = vmatpush1.msra.mxu0 0.0
        %1449 = vmatprep.subr.mxu0 0.0
        %1450 = vmatpush1.msra.mxu0 0.0
        %1451 = vmatprep.subr.mxu0 0.0
        %1452 = vmatpush1.msra.mxu0 0.0
        %1453 = vmatprep.subr.mxu0 0.0
        %1454 = vmatpush1.msra.mxu0 0.0
        %1455 = vmatprep.subr.mxu0 0.0
        %1456 = vmatpush1.msra.mxu0 0.0
        %1457 = vmatprep.subr.mxu0 0.0
        %1458 = vmatpush1.msra.mxu0 0.0
        %1459 = vmatprep.subr.mxu0 0.0
        %1460 = vmatpush1.msra.mxu0 0.0
        %1461 = vmatprep.subr.mxu0 0.0
        %1462 = vmatpush1.msra.mxu0 0.0
        %1463 = vmatprep.subr.mxu0 0.0
        %1464 = vmatpush1.msra.mxu0 0.0
        %1465 = vmatprep.subr.mxu0 0.0
        %1466 = vmatpush1.msra.mxu0 0.0
        %1467 = vmatprep.subr.mxu0 0.0
        %1468 = vmatpush1.msra.mxu0 0.0
        %1469 = vmatprep.subr.mxu0 0.0
        %1470 = vmatpush1.msra.mxu0 0.0
        %1471 = vmatprep.subr.mxu0 0.0
        %1472 = vmatpush1.msra.mxu0 0.0
        %1473 = vmatprep.subr.mxu0 0.0
        %1474 = vmatpush1.msra.mxu0 0.0
        %1475 = vmatprep.subr.mxu0 0.0
        %1476 = vmatpush1.msra.mxu0 0.0
        %1477 = vmatprep.subr.mxu0 0.0
        %1478 = vmatpush1.msra.mxu0 0.0
        %1479 = vmatprep.subr.mxu0 0.0
        %1480 = vmatpush1.msra.mxu0 0.0
        %1481 = vmatprep.subr.mxu0 0.0
        %1482 = vmatpush1.msra.mxu0 0.0
        %1483 = vmatprep.mubr.f32.mxu0 0.0
        %1484 = vmatmul.mubr.f32.gmra.mrb[0].mxu0 %v1417
        %v1485 = vpop.f32.mrb[0].mxu0
        %v1486 = vadd.f32 0.0, %v1485
        %v1487 = vpop.f32.mrb[0].mxu0
        %1488 = vdwg.mxu0
        %v1490 = vsel %vm899, %v943, 0
        %1492 = vmatprep.subr.mxu0 0.0
        %1493 = vmatpush1.msra.mxu0 %v1121
        %1494 = vmatprep.subr.mxu0 0.0
        %1495 = vmatpush1.msra.mxu0 0.0
        %1496 = vmatprep.subr.mxu0 0.0
        %1497 = vmatpush1.msra.mxu0 0.0
        %1498 = vmatprep.subr.mxu0 0.0
        %1499 = vmatpush1.msra.mxu0 0.0
        %1500 = vmatprep.subr.mxu0 0.0
        %1501 = vmatpush1.msra.mxu0 0.0
        %1502 = vmatprep.subr.mxu0 0.0
        %1503 = vmatpush1.msra.mxu0 0.0
        %1504 = vmatprep.subr.mxu0 0.0
        %1505 = vmatpush1.msra.mxu0 0.0
        %1506 = vmatprep.subr.mxu0 0.0
        %1507 = vmatpush1.msra.mxu0 0.0
        %1508 = vmatprep.subr.mxu0 0.0
        %1509 = vmatpush1.msra.mxu0 0.0
        %1510 = vmatprep.subr.mxu0 0.0
        %1511 = vmatpush1.msra.mxu0 0.0
        %1512 = vmatprep.subr.mxu0 0.0
        %1513 = vmatpush1.msra.mxu0 0.0
        %1514 = vmatprep.subr.mxu0 0.0
        %1515 = vmatpush1.msra.mxu0 0.0
        %1516 = vmatprep.subr.mxu0 0.0
        %1517 = vmatpush1.msra.mxu0 0.0
        %1518 = vmatprep.subr.mxu0 0.0
        %1519 = vmatpush1.msra.mxu0 0.0
        %1520 = vmatprep.subr.mxu0 0.0
        %1521 = vmatpush1.msra.mxu0 0.0
        %1522 = vmatprep.subr.mxu0 0.0
        %1523 = vmatpush1.msra.mxu0 0.0
        %1524 = vmatprep.subr.mxu0 0.0
        %1525 = vmatpush1.msra.mxu0 0.0
        %1526 = vmatprep.subr.mxu0 0.0
        %1527 = vmatpush1.msra.mxu0 0.0
        %1528 = vmatprep.subr.mxu0 0.0
        %1529 = vmatpush1.msra.mxu0 0.0
        %1530 = vmatprep.subr.mxu0 0.0
        %1531 = vmatpush1.msra.mxu0 0.0
        %1532 = vmatprep.subr.mxu0 0.0
        %1533 = vmatpush1.msra.mxu0 0.0
        %1534 = vmatprep.subr.mxu0 0.0
        %1535 = vmatpush1.msra.mxu0 0.0
        %1536 = vmatprep.subr.mxu0 0.0
        %1537 = vmatpush1.msra.mxu0 0.0
        %1538 = vmatprep.subr.mxu0 0.0
        %1539 = vmatpush1.msra.mxu0 0.0
        %1540 = vmatprep.subr.mxu0 0.0
        %1541 = vmatpush1.msra.mxu0 0.0
        %1542 = vmatprep.subr.mxu0 0.0
        %1543 = vmatpush1.msra.mxu0 0.0
        %1544 = vmatprep.subr.mxu0 0.0
        %1545 = vmatpush1.msra.mxu0 0.0
        %1546 = vmatprep.subr.mxu0 0.0
        %1547 = vmatpush1.msra.mxu0 0.0
        %1548 = vmatprep.subr.mxu0 0.0
        %1549 = vmatpush1.msra.mxu0 0.0
        %1550 = vmatprep.subr.mxu0 0.0
        %1551 = vmatpush1.msra.mxu0 0.0
        %1552 = vmatprep.subr.mxu0 0.0
        %1553 = vmatpush1.msra.mxu0 0.0
        %1554 = vmatprep.subr.mxu0 0.0
        %1555 = vmatpush1.msra.mxu0 0.0
        %1556 = vmatprep.mubr.f32.mxu0 0.0
        %1557 = vmatmul.mubr.f32.gmra.mrb[0].mxu0 %v1490
        %v1558 = vpop.f32.mrb[0].mxu0
        %v1559 = vadd.f32 0.0, %v1558
        %v1560 = vpop.f32.mrb[0].mxu0
        %1561 = vdwg.mxu0
        %v1563 = vsel %vm899, %v945, 0
        %1565 = vmatprep.subr.mxu0 0.0
        %1566 = vmatpush1.msra.mxu0 %v1122
        %1567 = vmatprep.subr.mxu0 0.0
        %1568 = vmatpush1.msra.mxu0 0.0
        %1569 = vmatprep.subr.mxu0 0.0
        %1570 = vmatpush1.msra.mxu0 0.0
        %1571 = vmatprep.subr.mxu0 0.0
        %1572 = vmatpush1.msra.mxu0 0.0
        %1573 = vmatprep.subr.mxu0 0.0
        %1574 = vmatpush1.msra.mxu0 0.0
        %1575 = vmatprep.subr.mxu0 0.0
        %1576 = vmatpush1.msra.mxu0 0.0
        %1577 = vmatprep.subr.mxu0 0.0
        %1578 = vmatpush1.msra.mxu0 0.0
        %1579 = vmatprep.subr.mxu0 0.0
        %1580 = vmatpush1.msra.mxu0 0.0
        %1581 = vmatprep.subr.mxu0 0.0
        %1582 = vmatpush1.msra.mxu0 0.0
        %1583 = vmatprep.subr.mxu0 0.0
        %1584 = vmatpush1.msra.mxu0 0.0
        %1585 = vmatprep.subr.mxu0 0.0
        %1586 = vmatpush1.msra.mxu0 0.0
        %1587 = vmatprep.subr.mxu0 0.0
        %1588 = vmatpush1.msra.mxu0 0.0
        %1589 = vmatprep.subr.mxu0 0.0
        %1590 = vmatpush1.msra.mxu0 0.0
        %1591 = vmatprep.subr.mxu0 0.0
        %1592 = vmatpush1.msra.mxu0 0.0
        %1593 = vmatprep.subr.mxu0 0.0
        %1594 = vmatpush1.msra.mxu0 0.0
        %1595 = vmatprep.subr.mxu0 0.0
        %1596 = vmatpush1.msra.mxu0 0.0
        %1597 = vmatprep.subr.mxu0 0.0
        %1598 = vmatpush1.msra.mxu0 0.0
        %1599 = vmatprep.subr.mxu0 0.0
        %1600 = vmatpush1.msra.mxu0 0.0
        %1601 = vmatprep.subr.mxu0 0.0
        %1602 = vmatpush1.msra.mxu0 0.0
        %1603 = vmatprep.subr.mxu0 0.0
        %1604 = vmatpush1.msra.mxu0 0.0
        %1605 = vmatprep.subr.mxu0 0.0
        %1606 = vmatpush1.msra.mxu0 0.0
        %1607 = vmatprep.subr.mxu0 0.0
        %1608 = vmatpush1.msra.mxu0 0.0
        %1609 = vmatprep.subr.mxu0 0.0
        %1610 = vmatpush1.msra.mxu0 0.0
        %1611 = vmatprep.subr.mxu0 0.0
        %1612 = vmatpush1.msra.mxu0 0.0
        %1613 = vmatprep.subr.mxu0 0.0
        %1614 = vmatpush1.msra.mxu0 0.0
        %1615 = vmatprep.subr.mxu0 0.0
        %1616 = vmatpush1.msra.mxu0 0.0
        %1617 = vmatprep.subr.mxu0 0.0
        %1618 = vmatpush1.msra.mxu0 0.0
        %1619 = vmatprep.subr.mxu0 0.0
        %1620 = vmatpush1.msra.mxu0 0.0
        %1621 = vmatprep.subr.mxu0 0.0
        %1622 = vmatpush1.msra.mxu0 0.0
        %1623 = vmatprep.subr.mxu0 0.0
        %1624 = vmatpush1.msra.mxu0 0.0
        %1625 = vmatprep.subr.mxu0 0.0
        %1626 = vmatpush1.msra.mxu0 0.0
        %1627 = vmatprep.subr.mxu0 0.0
        %1628 = vmatpush1.msra.mxu0 0.0
        %1629 = vmatprep.mubr.f32.mxu0 0.0
        %1630 = vmatmul.mubr.f32.gmra.mrb[0].mxu0 %v1563
        %v1631 = vpop.f32.mrb[0].mxu0
        %v1632 = vadd.f32 0.0, %v1631
        %v1633 = vpop.f32.mrb[0].mxu0
        %1634 = vdwg.mxu0
        %v1636 = vsel %vm899, %v947, 0
        %1638 = vmatprep.subr.mxu0 0.0
        %1639 = vmatpush1.msra.mxu0 %v1123
        %1640 = vmatprep.subr.mxu0 0.0
        %1641 = vmatpush1.msra.mxu0 0.0
        %1642 = vmatprep.subr.mxu0 0.0
        %1643 = vmatpush1.msra.mxu0 0.0
        %1644 = vmatprep.subr.mxu0 0.0
        %1645 = vmatpush1.msra.mxu0 0.0
        %1646 = vmatprep.subr.mxu0 0.0
        %1647 = vmatpush1.msra.mxu0 0.0
        %1648 = vmatprep.subr.mxu0 0.0
        %1649 = vmatpush1.msra.mxu0 0.0
        %1650 = vmatprep.subr.mxu0 0.0
        %1651 = vmatpush1.msra.mxu0 0.0
        %1652 = vmatprep.subr.mxu0 0.0
        %1653 = vmatpush1.msra.mxu0 0.0
        %1654 = vmatprep.subr.mxu0 0.0
        %1655 = vmatpush1.msra.mxu0 0.0
        %1656 = vmatprep.subr.mxu0 0.0
        %1657 = vmatpush1.msra.mxu0 0.0
        %1658 = vmatprep.subr.mxu0 0.0
        %1659 = vmatpush1.msra.mxu0 0.0
        %1660 = vmatprep.subr.mxu0 0.0
        %1661 = vmatpush1.msra.mxu0 0.0
        %1662 = vmatprep.subr.mxu0 0.0
        %1663 = vmatpush1.msra.mxu0 0.0
        %1664 = vmatprep.subr.mxu0 0.0
        %1665 = vmatpush1.msra.mxu0 0.0
        %1666 = vmatprep.subr.mxu0 0.0
        %1667 = vmatpush1.msra.mxu0 0.0
        %1668 = vmatprep.subr.mxu0 0.0
        %1669 = vmatpush1.msra.mxu0 0.0
        %1670 = vmatprep.subr.mxu0 0.0
        %1671 = vmatpush1.msra.mxu0 0.0
        %1672 = vmatprep.subr.mxu0 0.0
        %1673 = vmatpush1.msra.mxu0 0.0
        %1674 = vmatprep.subr.mxu0 0.0
        %1675 = vmatpush1.msra.mxu0 0.0
        %1676 = vmatprep.subr.mxu0 0.0
        %1677 = vmatpush1.msra.mxu0 0.0
        %1678 = vmatprep.subr.mxu0 0.0
        %1679 = vmatpush1.msra.mxu0 0.0
        %1680 = vmatprep.subr.mxu0 0.0
        %1681 = vmatpush1.msra.mxu0 0.0
        %1682 = vmatprep.subr.mxu0 0.0
        %1683 = vmatpush1.msra.mxu0 0.0
        %1684 = vmatprep.subr.mxu0 0.0
        %1685 = vmatpush1.msra.mxu0 0.0
        %1686 = vmatprep.subr.mxu0 0.0
        %1687 = vmatpush1.msra.mxu0 0.0
        %1688 = vmatprep.subr.mxu0 0.0
        %1689 = vmatpush1.msra.mxu0 0.0
        %1690 = vmatprep.subr.mxu0 0.0
        %1691 = vmatpush1.msra.mxu0 0.0
        %1692 = vmatprep.subr.mxu0 0.0
        %1693 = vmatpush1.msra.mxu0 0.0
        %1694 = vmatprep.subr.mxu0 0.0
        %1695 = vmatpush1.msra.mxu0 0.0
        %1696 = vmatprep.subr.mxu0 0.0
        %1697 = vmatpush1.msra.mxu0 0.0
        %1698 = vmatprep.subr.mxu0 0.0
        %1699 = vmatpush1.msra.mxu0 0.0
        %1700 = vmatprep.subr.mxu0 0.0
        %1701 = vmatpush1.msra.mxu0 0.0
        %1702 = vmatprep.mubr.f32.mxu0 0.0
        %1703 = vmatmul.mubr.f32.gmra.mrb[0].mxu0 %v1636
        %v1704 = vpop.f32.mrb[0].mxu0
        %v1705 = vadd.f32 0.0, %v1704
        %v1706 = vpop.f32.mrb[0].mxu0
        %1707 = vdwg.mxu0
        %v1708 = vmul.f32 %v1194, %v972
        %v1709 = vmul.f32 %v1267, %v973
        %v1710 = vmul.f32 %v1340, %v974
        %v1711 = vmul.f32 %v1413, %v975
        %v1712 = vmul.f32 %v1486, %v976
        %v1713 = vmul.f32 %v1559, %v977
        %v1714 = vmul.f32 %v1632, %v978
        %v1715 = vmul.f32 %v1705, %v979
        %1717 = vrot.lane.b32.xlu0 %v1709, 32
        %v1718 = vpop.permute.xlu0 %1717
        %1721 = vrot.lane.b32.xlu0 %v1710, 64
        %v1722 = vpop.permute.xlu0 %1721
        %1725 = vrot.lane.b32.xlu0 %v1711, 96
        %v1726 = vpop.permute.xlu0 %1725
        %1729 = vrot.lane.b32.xlu0 %v1713, 32
        %v1730 = vpop.permute.xlu0 %1729
        %1733 = vrot.lane.b32.xlu0 %v1714, 64
        %v1734 = vpop.permute.xlu0 %1733
        %1737 = vrot.lane.b32.xlu0 %v1715, 96
        %v1738 = vpop.permute.xlu0 %1737
        %v1740 = vsel %vm290, %v1708, %v1718
        %vm1741 = vcmask 523264
        %v1742 = vsel %vm1741, %v1740, %v1722
        %vm1743 = vcmask 785408
        %v1744 = vsel %vm1743, %v1742, %v1726
        %v1745 = vsel %vm290, %v1712, %v1730
        %v1746 = vsel %vm1741, %v1745, %v1734
        %v1747 = vsel %vm1743, %v1746, %v1738
        %1748 = vst [vmem:[%s265] sm:$0xff] %v1744
        %1749 = vst [vmem:[%s265 + $0x8] sm:$0xff] %v1747
        %s1750 = sand.u32 %s109, 1
        %s1751 = scalar_lea.sflag [#allocation4], %s1750
        %s1752 = sand.u32 %s109, 1
        %s1753 = smul.addr %s1752, 16
        %s1754 = scalar_lea.vmem [#allocation8], %s1753
        // Predicated region
        $region45: #{tpu_custom_call.1} parent=31 // pred_check
          %p1755 = pneg %p119
        $region46: #{tpu_custom_call.1} parent=31 // pred_check_branch
          %1757 = sbr.rel (%p1755) target = $region48
        $region47: #{tpu_custom_call.1} parent=31 // pred_region
          %s1759 = ssub.s32 256, 256
          %1760 = vsyncadd %s1751, %s1759
          %s1761 = smul.addr %s23, 2
          %s1762 = smul.addr %s1761, 128
          %s1763 = scalar_lea.hbm %s3, %s1762
          %s1765 = sshll.u32 %s1754, 4
          %s1766 = int_to_ptr.vmem [resolvable:$true] %s1765
          %1768 = dma.vmem_to_hbm [thread:$0]  %s1766, 256, %s1763, %s1751
        $region48: #{tpu_custom_call.1} parent=31 // pred_fallthru
          _
      $region32: #{tpu_custom_call.1} parent=5 // pred_fallthru
        _
      %p1769 = scmp.le.s32.totalorder 2, %s18
      // Predicated region
      $region49: #{tpu_custom_call.1} parent=5 // pred_check
        %p1770 = pneg %p1769
      $region50: #{tpu_custom_call.1} parent=5 // pred_check_branch
        %1772 = sbr.rel (%p1770) target = $region52
      $region51: #{tpu_custom_call.1} parent=5 // pred_region
        %s1773 = ssub.s32 %s18, 2
        // Predicated region
        $region53: #{tpu_custom_call.1} parent=51 // pred_check
          %p1774 = pneg %p125
        $region54: #{tpu_custom_call.1} parent=51 // pred_check_branch
          %1776 = sbr.rel (%p1774) target = $region56
        $region55: #{tpu_custom_call.1} parent=51 // pred_region
          %s1777 = sand.u32 %s110, 1
          %s1778 = scalar_lea.sflag [#allocation4], %s1777
          %s1779 = sand.u32 %s110, 1
          %s1780 = smul.addr %s1779, 16
          %s1781 = scalar_lea.vmem [#allocation8], %s1780
          %1782 = dma.done %s1778, 256
        $region56: #{tpu_custom_call.1} parent=51 // pred_fallthru
          _
      $region52: #{tpu_custom_call.1} parent=5 // pred_fallthru
        _
    $region6: #{tpu_custom_call.1} parent=1 // loop_footer
      %s22 = sadd.s32 1, %s18
    $region7: #{tpu_custom_call.1} parent=1 // loop_footer_branch
      %17 = sbr.rel target = $region3
    $region8: #{tpu_custom_call.1} parent=1 // loop_exit
      _
    %1783 = vsyncpa [#allocation3], 1
    %s1784 = scalar_lea.sflag [#allocation3], 1
    %1785 = vsyncpa %s1784, 1
    %1786 = vsyncpa [#allocation6], 1
    %s1787 = scalar_lea.sflag [#allocation6], 1
    %1788 = vsyncpa %s1787, 1
    %1789 = vsyncpa [#allocation4], 1
    %s1790 = scalar_lea.sflag [#allocation4], 1
    %1791 = vsyncpa %s1790, 1

</llo_original>
